<compile_context>
chip_gen: v7x
topology: tpu7x:2x2x1
jax: 0.10.0
libtpu: 0.0.40
codegen_flags: <defaults>
</compile_context>

<pallas_src>
import functools

import jax
import jax.numpy as jnp
from jax.experimental import pallas as pl
from jax.experimental.pallas import tpu as pltpu

# True layer sizes from the module __init__, and lane-multiple padded sizes.
DIMS = [601, 300, 100, 100, 100, 1]
PAD = [640, 384, 128, 128, 128, 128]   # last entry: output padded to a lane-dense slab


def _round_up(x, m):
    return (x + m - 1) // m * m


def _mlp_kernel(x_ref,
                w1, b1, w2, b2, w3, b3, w4, b4, w5, b5,
                o_ref):
    """Full 5-layer MLP for one batch tile.

    x_ref: (tb, 640) bf16.  Weights w1..w4: bf16, padded, (in_pad, out_pad).
    w5: (1, 128) bf16 row (final layer as a VPU/XLU reduction).
    Biases: f32 (1, out_pad); b5 is broadcast across all 128 output lanes.
    o_ref: (tb, 128) f32 lane-dense slab, every lane = policy output.
    """
    h = x_ref[...]                                                     # bf16
    h = jnp.dot(h, w1[...], preferred_element_type=jnp.float32) + b1[...]
    h = jnp.maximum(h, 0.0)
    h = jnp.dot(h.astype(jnp.bfloat16), w2[...],
                preferred_element_type=jnp.float32) + b2[...]
    h = jnp.maximum(h, 0.0)
    h = jnp.dot(h.astype(jnp.bfloat16), w3[...],
                preferred_element_type=jnp.float32) + b3[...]
    h = jnp.maximum(h, 0.0)
    h = jnp.dot(h.astype(jnp.bfloat16), w4[...],
                preferred_element_type=jnp.float32) + b4[...]
    h = jnp.maximum(h, 0.0)                                            # (tb, 128) f32

    # Final Linear(100,1): lane reduction on the VPU/XLU instead of an N=1 matmul.
    w5_row = w5[...].astype(jnp.float32)                               # (1, 128)
    h5 = jnp.sum(h * w5_row, axis=-1, keepdims=True)                   # (tb, 1) f32
    # Lane-dense store: broadcast the scalar across all 128 output lanes.
    o_ref[...] = (h5 + b5[...]).astype(o_ref.dtype)                    # (tb, 128)


def prepare_params(params):
    """Zero-pad to lane multiples and cast weights to bf16 (done once, offline).

    params: flat list [w1, b1, ..., w5, b5] with w (d_in, d_out) f32, b (1, d_out) f32.
    Returns the flat list of padded arrays expected by the kernel.
    """
    prepped = []
    n_layers = len(DIMS) - 1
    for li in range(n_layers):
        w = params[2 * li]
        b = params[2 * li + 1]
        d_in, d_out = w.shape
        p_in, p_out = PAD[li], PAD[li + 1]
        if li < n_layers - 1:
            wp = jnp.zeros((p_in, p_out), jnp.float32).at[:d_in, :d_out].set(w)
            bp = jnp.zeros((1, p_out), jnp.float32).at[:, :d_out].set(b)
        else:
            # Final layer: weight as a (1, p_in) row for the VPU reduction,
            # bias value broadcast across all output lanes (lane-dense output).
            wp = jnp.zeros((1, p_in), jnp.float32).at[0, :d_in].set(w[:, 0])
            bp = jnp.full((1, p_out), b[0, 0], jnp.float32)
        prepped.append(wp.astype(jnp.bfloat16))   # weights in bf16 (halves DMA)
        prepped.append(bp)                        # biases stay f32
    return prepped


@functools.partial(jax.jit, static_argnames=("tb_target",))
def model_forward(x, prepped_params, *, tb_target=512):
    """x: (..., 601) float32. Returns (..., 1) float32."""
    lead = x.shape[:-1]
    xf = x.reshape(-1, DIMS[0]).astype(jnp.float32)
    B = xf.shape[0]

    # Tile choice: one padded tile for small batches, tb_target (512) otherwise.
    tb = min(tb_target, _round_up(max(B, 1), 8))
    B_pad = _round_up(B, tb)

    # Pad batch to a tile multiple and features to 640; cast input to bf16.
    xp = jnp.zeros((B_pad, PAD[0]), jnp.bfloat16)
    xp = xp.at[:B, :DIMS[0]].set(xf.astype(jnp.bfloat16))

    # Input batch tile; weights/biases as single full blocks (constant index_map
    # => fetched once, not re-DMA'd per grid step).
    def full_spec(shape):
        return pl.BlockSpec(shape, lambda i: (0, 0))

    in_specs = [pl.BlockSpec((tb, PAD[0]), lambda i: (i, 0))]
    n_layers = len(DIMS) - 1
    for li in range(n_layers):
        p_in, p_out = PAD[li], PAD[li + 1]
        if li < n_layers - 1:
            in_specs.append(full_spec((p_in, p_out)))   # weight
        else:
            in_specs.append(full_spec((1, p_in)))        # final weight row
        in_specs.append(full_spec((1, p_out)))           # bias

    out = pl.pallas_call(
        _mlp_kernel,
        out_shape=jax.ShapeDtypeStruct((B_pad, PAD[-1]), jnp.float32),
        grid_spec=pltpu.PrefetchScalarGridSpec(
            num_scalar_prefetch=0,
            grid=(B_pad // tb,),
            in_specs=in_specs,
            out_specs=pl.BlockSpec((tb, PAD[-1]), lambda i: (i, 0)),
        ),
        compiler_params=pltpu.CompilerParams(
            dimension_semantics=("parallel",),
            vmem_limit_bytes=32 * 1024 * 1024),
    )(xp, *prepped_params)

    # Lane 0 of the lane-dense slab carries the result; drop batch padding.
    return out[:B, :1].reshape(*lead, DIMS[-1])


def init_params(key):
    """Deterministic init mimicking PyTorch nn.Linear default (U[-1/sqrt(fan_in), +])."""
    params = []
    for d_in, d_out in zip(DIMS[:-1], DIMS[1:]):
        key, kw, kb = jax.random.split(key, 3)
        bound = 1.0 / (d_in ** 0.5)
        w = jax.random.uniform(kw, (d_in, d_out), jnp.float32, -bound, bound)
        b = jax.random.uniform(kb, (1, d_out), jnp.float32, -bound, bound)
        params.append(w)
        params.append(b)
    return params


def reference_forward(x, params):
    """Pure-JAX reference mirroring the kernel's bf16-weight / bf16-activation numerics."""
    lead = x.shape[:-1]
    h = x.reshape(-1, DIMS[0])
    n_layers = len(DIMS) - 1
    for li in range(n_layers):
        w = params[2 * li].astype(jnp.bfloat16).astype(jnp.float32)
        b = params[2 * li + 1]
        if li < n_layers - 1:
            h = jnp.dot(h.astype(jnp.bfloat16).astype(jnp.float32), w,
                        preferred_element_type=jnp.float32) + b
            h = jnp.maximum(h, 0.0)
        else:
            h = jnp.dot(h, w, preferred_element_type=jnp.float32) + b
    return h.reshape(*lead, DIMS[-1])


if __name__ == "__main__":
    key = jax.random.PRNGKey(0)
    key, kp, kx = jax.random.split(key, 3)
    params = init_params(kp)
    prepped = prepare_params(params)

    # Small input consistent with the module: (batch=2, seq=8, features=601).
    x = jax.random.normal(kx, (2, 8, 601), jnp.float32)

    out = model_forward(x, prepped)
    out = jax.block_until_ready(out)

    ref = reference_forward(x, params)
    assert out.shape == (2, 8, 1), out.shape
    err = float(jnp.max(jnp.abs(out - ref)))
    assert err < 1e-3, err

    print("KERNEL_OK")
</pallas_src>

<mosaic_0001>
module attributes {stable_mosaic.version = 11 : i64} {
  func.func @_mlp_kernel(%arg0: i32, %arg1: memref<16x640xbf16, #tpu.memory_space<vmem>>, %arg2: memref<640x384xbf16, #tpu.memory_space<vmem>>, %arg3: memref<1x384xf32, #tpu.memory_space<vmem>>, %arg4: memref<384x128xbf16, #tpu.memory_space<vmem>>, %arg5: memref<1x128xf32, #tpu.memory_space<vmem>>, %arg6: memref<128x128xbf16, #tpu.memory_space<vmem>>, %arg7: memref<1x128xf32, #tpu.memory_space<vmem>>, %arg8: memref<128x128xbf16, #tpu.memory_space<vmem>>, %arg9: memref<1x128xf32, #tpu.memory_space<vmem>>, %arg10: memref<1x128xbf16, #tpu.memory_space<vmem>>, %arg11: memref<1x128xf32, #tpu.memory_space<vmem>>, %arg12: memref<16x128xf32, #tpu.memory_space<vmem>>) attributes {dimension_semantics = [#tpu.dimension_semantics<parallel>], iteration_bounds = array<i64: 1>, scalar_prefetch = 0 : i64, scratch_operands = 0 : i64, tpu.core_type = #tpu.core_type<tc>, window_params = [{transform_indices = @transform_0, window_bounds = array<i64: 16, 640>}, {pipeline_mode = #tpu.pipeline_mode<synchronous>, transform_indices = @transform_1, window_bounds = array<i64: 640, 384>}, {pipeline_mode = #tpu.pipeline_mode<synchronous>, transform_indices = @transform_2, window_bounds = array<i64: 1, 384>}, {pipeline_mode = #tpu.pipeline_mode<synchronous>, transform_indices = @transform_3, window_bounds = array<i64: 384, 128>}, {pipeline_mode = #tpu.pipeline_mode<synchronous>, transform_indices = @transform_4, window_bounds = array<i64: 1, 128>}, {pipeline_mode = #tpu.pipeline_mode<synchronous>, transform_indices = @transform_5, window_bounds = array<i64: 128, 128>}, {pipeline_mode = #tpu.pipeline_mode<synchronous>, transform_indices = @transform_6, window_bounds = array<i64: 1, 128>}, {pipeline_mode = #tpu.pipeline_mode<synchronous>, transform_indices = @transform_7, window_bounds = array<i64: 128, 128>}, {pipeline_mode = #tpu.pipeline_mode<synchronous>, transform_indices = @transform_8, window_bounds = array<i64: 1, 128>}, {pipeline_mode = #tpu.pipeline_mode<synchronous>, transform_indices = @transform_9, window_bounds = array<i64: 1, 128>}, {pipeline_mode = #tpu.pipeline_mode<synchronous>, transform_indices = @transform_10, window_bounds = array<i64: 1, 128>}, {transform_indices = @transform_11, window_bounds = array<i64: 16, 128>}]} {
    %c0 = arith.constant 0 : index
    %c0_0 = arith.constant 0 : index
    %0 = vector.load %arg1[%c0, %c0_0] : memref<16x640xbf16, #tpu.memory_space<vmem>>, vector<16x640xbf16>
    %c0_1 = arith.constant 0 : index
    %c0_2 = arith.constant 0 : index
    %1 = vector.load %arg2[%c0_1, %c0_2] : memref<640x384xbf16, #tpu.memory_space<vmem>>, vector<640x384xbf16>
    %cst = arith.constant dense<0.000000e+00> : vector<16x384xf32>
    %2 = tpu.matmul %0, %1, %cst {dimension_numbers = #tpu.dot_dimension_numbers<[1], [0], [0], [1], [0, 0, 1, 1], [], []>} : vector<16x640xbf16>, vector<640x384xbf16>, vector<16x384xf32> -> vector<16x384xf32>
    %c0_3 = arith.constant 0 : index
    %c0_4 = arith.constant 0 : index
    %3 = vector.load %arg3[%c0_3, %c0_4] : memref<1x384xf32, #tpu.memory_space<vmem>>, vector<1x384xf32>
    %4 = vector.broadcast %3 : vector<1x384xf32> to vector<16x384xf32>
    %5 = arith.addf %2, %4 : vector<16x384xf32>
    %cst_5 = arith.constant 0.000000e+00 : f32
    %6 = vector.broadcast %cst_5 : f32 to vector<16x384xf32>
    %7 = arith.maximumf %5, %6 : vector<16x384xf32>
    %8 = arith.truncf %7 : vector<16x384xf32> to vector<16x384xbf16>
    %c0_6 = arith.constant 0 : index
    %c0_7 = arith.constant 0 : index
    %9 = vector.load %arg4[%c0_6, %c0_7] : memref<384x128xbf16, #tpu.memory_space<vmem>>, vector<384x128xbf16>
    %cst_8 = arith.constant dense<0.000000e+00> : vector<16x128xf32>
    %10 = tpu.matmul %8, %9, %cst_8 {dimension_numbers = #tpu.dot_dimension_numbers<[1], [0], [0], [1], [0, 0, 1, 1], [], []>} : vector<16x384xbf16>, vector<384x128xbf16>, vector<16x128xf32> -> vector<16x128xf32>
    %c0_9 = arith.constant 0 : index
    %c0_10 = arith.constant 0 : index
    %11 = vector.load %arg5[%c0_9, %c0_10] : memref<1x128xf32, #tpu.memory_space<vmem>>, vector<1x128xf32>
    %12 = vector.broadcast %11 : vector<1x128xf32> to vector<16x128xf32>
    %13 = arith.addf %10, %12 : vector<16x128xf32>
    %cst_11 = arith.constant 0.000000e+00 : f32
    %14 = vector.broadcast %cst_11 : f32 to vector<16x128xf32>
    %15 = arith.maximumf %13, %14 : vector<16x128xf32>
    %16 = arith.truncf %15 : vector<16x128xf32> to vector<16x128xbf16>
    %c0_12 = arith.constant 0 : index
    %c0_13 = arith.constant 0 : index
    %17 = vector.load %arg6[%c0_12, %c0_13] : memref<128x128xbf16, #tpu.memory_space<vmem>>, vector<128x128xbf16>
    %cst_14 = arith.constant dense<0.000000e+00> : vector<16x128xf32>
    %18 = tpu.matmul %16, %17, %cst_14 {dimension_numbers = #tpu.dot_dimension_numbers<[1], [0], [0], [1], [0, 0, 1, 1], [], []>} : vector<16x128xbf16>, vector<128x128xbf16>, vector<16x128xf32> -> vector<16x128xf32>
    %c0_15 = arith.constant 0 : index
    %c0_16 = arith.constant 0 : index
    %19 = vector.load %arg7[%c0_15, %c0_16] : memref<1x128xf32, #tpu.memory_space<vmem>>, vector<1x128xf32>
    %20 = vector.broadcast %19 : vector<1x128xf32> to vector<16x128xf32>
    %21 = arith.addf %18, %20 : vector<16x128xf32>
    %cst_17 = arith.constant 0.000000e+00 : f32
    %22 = vector.broadcast %cst_17 : f32 to vector<16x128xf32>
    %23 = arith.maximumf %21, %22 : vector<16x128xf32>
    %24 = arith.truncf %23 : vector<16x128xf32> to vector<16x128xbf16>
    %c0_18 = arith.constant 0 : index
    %c0_19 = arith.constant 0 : index
    %25 = vector.load %arg8[%c0_18, %c0_19] : memref<128x128xbf16, #tpu.memory_space<vmem>>, vector<128x128xbf16>
    %cst_20 = arith.constant dense<0.000000e+00> : vector<16x128xf32>
    %26 = tpu.matmul %24, %25, %cst_20 {dimension_numbers = #tpu.dot_dimension_numbers<[1], [0], [0], [1], [0, 0, 1, 1], [], []>} : vector<16x128xbf16>, vector<128x128xbf16>, vector<16x128xf32> -> vector<16x128xf32>
    %c0_21 = arith.constant 0 : index
    %c0_22 = arith.constant 0 : index
    %27 = vector.load %arg9[%c0_21, %c0_22] : memref<1x128xf32, #tpu.memory_space<vmem>>, vector<1x128xf32>
    %28 = vector.broadcast %27 : vector<1x128xf32> to vector<16x128xf32>
    %29 = arith.addf %26, %28 : vector<16x128xf32>
    %cst_23 = arith.constant 0.000000e+00 : f32
    %30 = vector.broadcast %cst_23 : f32 to vector<16x128xf32>
    %31 = arith.maximumf %29, %30 : vector<16x128xf32>
    %c0_24 = arith.constant 0 : index
    %c0_25 = arith.constant 0 : index
    %32 = vector.load %arg10[%c0_24, %c0_25] : memref<1x128xbf16, #tpu.memory_space<vmem>>, vector<1x128xbf16>
    %33 = arith.extf %32 : vector<1x128xbf16> to vector<1x128xf32>
    %34 = vector.broadcast %33 : vector<1x128xf32> to vector<16x128xf32>
    %35 = arith.mulf %31, %34 : vector<16x128xf32>
    %cst_26 = arith.constant dense<0.000000e+00> : vector<16xf32>
    %36 = vector.multi_reduction <add>, %35, %cst_26 [1] : vector<16x128xf32> to vector<16xf32>
    %37 = vector.shape_cast %36 : vector<16xf32> to vector<16x1xf32>
    %c0_27 = arith.constant 0 : index
    %c0_28 = arith.constant 0 : index
    %38 = vector.load %arg11[%c0_27, %c0_28] : memref<1x128xf32, #tpu.memory_space<vmem>>, vector<1x128xf32>
    %39 = vector.broadcast %37 : vector<16x1xf32> to vector<16x128xf32>
    %40 = vector.broadcast %38 : vector<1x128xf32> to vector<16x128xf32>
    %41 = arith.addf %39, %40 : vector<16x128xf32>
    %c0_29 = arith.constant 0 : index
    %c0_30 = arith.constant 0 : index
    %42 = vector.load %arg12[%c0_29, %c0_30] : memref<16x128xf32, #tpu.memory_space<vmem>>, vector<16x128xf32>
    tpu.vector_store %arg12[%c0_29, %c0_30], %41 {strides = array<i32>} : memref<16x128xf32, #tpu.memory_space<vmem>>, vector<16x128xf32>,
    return
  }
  func.func @transform_0(%arg0: i32) -> (i32, i32) {
    %c0_i32 = arith.constant 0 : i32
    %c0_i32_0 = arith.constant 0 : i32
    return %arg0, %c0_i32 : i32, i32
  }
  func.func @transform_1(%arg0: i32) -> (i32, i32) {
    %c0_i32 = arith.constant 0 : i32
    %c0_i32_0 = arith.constant 0 : i32
    %c0_i32_1 = arith.constant 0 : i32
    return %c0_i32, %c0_i32_0 : i32, i32
  }
  func.func @transform_2(%arg0: i32) -> (i32, i32) {
    %c0_i32 = arith.constant 0 : i32
    %c0_i32_0 = arith.constant 0 : i32
    %c0_i32_1 = arith.constant 0 : i32
    return %c0_i32, %c0_i32_0 : i32, i32
  }
  func.func @transform_3(%arg0: i32) -> (i32, i32) {
    %c0_i32 = arith.constant 0 : i32
    %c0_i32_0 = arith.constant 0 : i32
    %c0_i32_1 = arith.constant 0 : i32
    return %c0_i32, %c0_i32_0 : i32, i32
  }
  func.func @transform_4(%arg0: i32) -> (i32, i32) {
    %c0_i32 = arith.constant 0 : i32
    %c0_i32_0 = arith.constant 0 : i32
    %c0_i32_1 = arith.constant 0 : i32
    return %c0_i32, %c0_i32_0 : i32, i32
  }
  func.func @transform_5(%arg0: i32) -> (i32, i32) {
    %c0_i32 = arith.constant 0 : i32
    %c0_i32_0 = arith.constant 0 : i32
    %c0_i32_1 = arith.constant 0 : i32
    return %c0_i32, %c0_i32_0 : i32, i32
  }
  func.func @transform_6(%arg0: i32) -> (i32, i32) {
    %c0_i32 = arith.constant 0 : i32
    %c0_i32_0 = arith.constant 0 : i32
    %c0_i32_1 = arith.constant 0 : i32
    return %c0_i32, %c0_i32_0 : i32, i32
  }
  func.func @transform_7(%arg0: i32) -> (i32, i32) {
    %c0_i32 = arith.constant 0 : i32
    %c0_i32_0 = arith.constant 0 : i32
    %c0_i32_1 = arith.constant 0 : i32
    return %c0_i32, %c0_i32_0 : i32, i32
  }
  func.func @transform_8(%arg0: i32) -> (i32, i32) {
    %c0_i32 = arith.constant 0 : i32
    %c0_i32_0 = arith.constant 0 : i32
    %c0_i32_1 = arith.constant 0 : i32
    return %c0_i32, %c0_i32_0 : i32, i32
  }
  func.func @transform_9(%arg0: i32) -> (i32, i32) {
    %c0_i32 = arith.constant 0 : i32
    %c0_i32_0 = arith.constant 0 : i32
    %c0_i32_1 = arith.constant 0 : i32
    return %c0_i32, %c0_i32_0 : i32, i32
  }
  func.func @transform_10(%arg0: i32) -> (i32, i32) {
    %c0_i32 = arith.constant 0 : i32
    %c0_i32_0 = arith.constant 0 : i32
    %c0_i32_1 = arith.constant 0 : i32
    return %c0_i32, %c0_i32_0 : i32, i32
  }
  func.func @transform_11(%arg0: i32) -> (i32, i32) {
    %c0_i32 = arith.constant 0 : i32
    %c0_i32_0 = arith.constant 0 : i32
    return %arg0, %c0_i32 : i32, i32
  }
}

</mosaic_0001>

<llo_original>
// kernel: model_forward.1
$region0: #{model_forward.1}
  #allocation0 [shape = 'u32[]', space=smem, size = 0x4, offset = 0x4, fixed_abs, tag = 'smem constant byte address 0x4 - core index']
  #allocation1 [shape = 'u32[144,128]{1,0:T(1,128)}', space=vmem, size = 0x12000, scoped, tag = 'internal scratch']
  %s0 = inlined_call_operand.vmem [shape: bf16[16,640], index: 0, kind: input, shape index: {}]
  %s1 = inlined_call_operand.hbm [shape: bf16[640,384], index: 1, kind: input, shape index: {}]
  %s2 = inlined_call_operand.vmem [shape: f32[1,384], index: 2, kind: input, shape index: {}]
  %s3 = inlined_call_operand.vmem [shape: bf16[384,128], index: 3, kind: input, shape index: {}]
  %s4 = inlined_call_operand.vmem [shape: f32[1,128], index: 4, kind: input, shape index: {}]
  %s5 = inlined_call_operand.hbm [shape: bf16[128,128], index: 5, kind: input, shape index: {}]
  %s6 = inlined_call_operand.vmem [shape: f32[1,128], index: 6, kind: input, shape index: {}]
  %s7 = inlined_call_operand.hbm [shape: bf16[128,128], index: 7, kind: input, shape index: {}]
  %s8 = inlined_call_operand.vmem [shape: f32[1,128], index: 8, kind: input, shape index: {}]
  %s9 = inlined_call_operand.vmem [shape: bf16[1,128], index: 9, kind: input, shape index: {}]
  %s10 = inlined_call_operand.vmem [shape: f32[1,128], index: 10, kind: input, shape index: {}]
  %s11 = inlined_call_operand.vmem [shape: f32[16,128], index: 11, kind: output, shape index: {}]
  %s12 = sld [smem:[#allocation0]]
  $region66: #{model_forward.1} parent=0
    _
  %s14 = ssub.s32 1, %s12
  %s15 = scalar_select 0, %s14, %s12
  $region1: #{model_forward.1} parent=0
    #allocation2 [shape = 'u8[491520]{0}', space=vmem, size = 0x78000, scoped, tag = 'input window, operand 1, single buffered']
    #allocation3 [shape = 's32[1]{0}', space=sflag, size = 0x4, scoped, tag = 'scoped memory for model_forward.1']
    #allocation4 [shape = 'u8[32768]{0}', space=vmem, size = 0x8000, scoped, tag = 'input window, operand 5, single buffered']
    #allocation5 [shape = 's32[1]{0}', space=sflag, size = 0x4, scoped, tag = 'scoped memory for model_forward.1']
    #allocation6 [shape = 'u8[32768]{0}', space=vmem, size = 0x8000, scoped, tag = 'input window, operand 7, single buffered']
    %16 = vsyncpa [#allocation3], 0
    %17 = vsyncpa [#allocation5], 0
    // Predicated region
    $region2: #{model_forward.1} parent=1 // pred_check
      _
    $region3: #{model_forward.1} parent=1 // pred_check_branch
      %19 = sbr.rel (0) target = $region5
    $region4: #{model_forward.1} parent=1 // pred_region
      _
    $region5: #{model_forward.1} parent=1 // pred_fallthru
      _
    // Predicated region
    $region6: #{model_forward.1} parent=1 // pred_check
      _
    $region7: #{model_forward.1} parent=1 // pred_check_branch
      %21 = sbr.rel (0) target = $region9
    $region8: #{model_forward.1} parent=1 // pred_region
      %s23 = ssub.s32 15360, 15360
      %24 = vsyncadd [#allocation3], %s23
      %s25 = sshll.u32 [#allocation2], 4
      %s26 = int_to_ptr.vmem [resolvable:$true] %s25
      %31 = dma.hbm_to_vmem [thread:$0]  %s1, 15360, %s26, [#allocation3], 192, 192, 12
    $region9: #{model_forward.1} parent=1 // pred_fallthru
      _
    // Predicated region
    $region10: #{model_forward.1} parent=1 // pred_check
      _
    $region11: #{model_forward.1} parent=1 // pred_check_branch
      %33 = sbr.rel (0) target = $region13
    $region12: #{model_forward.1} parent=1 // pred_region
      _
    $region13: #{model_forward.1} parent=1 // pred_fallthru
      _
    // Predicated region
    $region14: #{model_forward.1} parent=1 // pred_check
      _
    $region15: #{model_forward.1} parent=1 // pred_check_branch
      %35 = sbr.rel (0) target = $region17
    $region16: #{model_forward.1} parent=1 // pred_region
      _
    $region17: #{model_forward.1} parent=1 // pred_fallthru
      _
    // Predicated region
    $region18: #{model_forward.1} parent=1 // pred_check
      _
    $region19: #{model_forward.1} parent=1 // pred_check_branch
      %37 = sbr.rel (0) target = $region21
    $region20: #{model_forward.1} parent=1 // pred_region
      _
    $region21: #{model_forward.1} parent=1 // pred_fallthru
      _
    // Predicated region
    $region22: #{model_forward.1} parent=1 // pred_check
      _
    $region23: #{model_forward.1} parent=1 // pred_check_branch
      %39 = sbr.rel (0) target = $region25
    $region24: #{model_forward.1} parent=1 // pred_region
      %s41 = ssub.s32 1024, 1024
      %42 = vsyncadd [#allocation5], %s41
      %s43 = sshll.u32 [#allocation4], 4
      %s44 = int_to_ptr.vmem [resolvable:$true] %s43
      %49 = dma.hbm_to_vmem [thread:$0]  %s5, 1024, %s44, [#allocation5], 64, 64, 4
    $region25: #{model_forward.1} parent=1 // pred_fallthru
      _
    // Predicated region
    $region26: #{model_forward.1} parent=1 // pred_check
      _
    $region27: #{model_forward.1} parent=1 // pred_check_branch
      %51 = sbr.rel (0) target = $region29
    $region28: #{model_forward.1} parent=1 // pred_region
      _
    $region29: #{model_forward.1} parent=1 // pred_fallthru
      _
    // Predicated region
    $region30: #{model_forward.1} parent=1 // pred_check
      _
    $region31: #{model_forward.1} parent=1 // pred_check_branch
      %53 = sbr.rel (0) target = $region33
    $region32: #{model_forward.1} parent=1 // pred_region
      %s55 = ssub.s32 1024, 1024
      %56 = vsyncadd [#allocation5], %s55
      %s57 = sshll.u32 [#allocation6], 4
      %s58 = int_to_ptr.vmem [resolvable:$true] %s57
      %63 = dma.hbm_to_vmem [thread:$0]  %s7, 1024, %s58, [#allocation5], 64, 64, 4
    $region33: #{model_forward.1} parent=1 // pred_fallthru
      _
    // Predicated region
    $region34: #{model_forward.1} parent=1 // pred_check
      _
    $region35: #{model_forward.1} parent=1 // pred_check_branch
      %65 = sbr.rel (0) target = $region37
    $region36: #{model_forward.1} parent=1 // pred_region
      _
    $region37: #{model_forward.1} parent=1 // pred_fallthru
      _
    // Predicated region
    $region38: #{model_forward.1} parent=1 // pred_check
      _
    $region39: #{model_forward.1} parent=1 // pred_check_branch
      %67 = sbr.rel (0) target = $region41
    $region40: #{model_forward.1} parent=1 // pred_region
      _
    $region41: #{model_forward.1} parent=1 // pred_fallthru
      _
    // Predicated region
    $region42: #{model_forward.1} parent=1 // pred_check
      _
    $region43: #{model_forward.1} parent=1 // pred_check_branch
      %69 = sbr.rel (0) target = $region45
    $region44: #{model_forward.1} parent=1 // pred_region
      _
    $region45: #{model_forward.1} parent=1 // pred_fallthru
      _
    // Predicated region
    $region46: #{model_forward.1} parent=1 // pred_check
      _
    $region47: #{model_forward.1} parent=1 // pred_check_branch
      %71 = sbr.rel (0) target = $region49
    $region48: #{model_forward.1} parent=1 // pred_region
      %72 = dma.done [#allocation3], 15360
    $region49: #{model_forward.1} parent=1 // pred_fallthru
      _
    // Predicated region
    $region50: #{model_forward.1} parent=1 // pred_check
      _
    $region51: #{model_forward.1} parent=1 // pred_check_branch
      %74 = sbr.rel (0) target = $region53
    $region52: #{model_forward.1} parent=1 // pred_region
      %75 = dma.done [#allocation5], 1024
    $region53: #{model_forward.1} parent=1 // pred_fallthru
      _
    // Predicated region
    $region54: #{model_forward.1} parent=1 // pred_check
      _
    $region55: #{model_forward.1} parent=1 // pred_check_branch
      %77 = sbr.rel (0) target = $region57
    $region56: #{model_forward.1} parent=1 // pred_region
      %78 = dma.done [#allocation5], 1024
    $region57: #{model_forward.1} parent=1 // pred_fallthru
      _
    %v80 = vld [vmem:[%s0] sm:$0xff]
    %v81 = vld [vmem:[%s0 + $0x8] sm:$0xff]
    %v82 = vld [vmem:[%s0 + $0x10] sm:$0xf]
    %v83 = vld [vmem:[%s0 + $0x14] sm:$0xff]
    %v84 = vld [vmem:[%s0 + $0x1c] sm:$0xff]
    %v85 = vld [vmem:[%s0 + $0x24] sm:$0xf]
    %v86 = vld [vmem:[#allocation2] sm:$0xff]
    %v87 = vld [vmem:[#allocation2 + $0x8] sm:$0xf]
    %v88 = vld [vmem:[#allocation2 + $0xc] sm:$0xff]
    %v89 = vld [vmem:[#allocation2 + $0x14] sm:$0xf]
    %v90 = vld [vmem:[#allocation2 + $0x18] sm:$0xff]
    %v91 = vld [vmem:[#allocation2 + $0x20] sm:$0xf]
    %v92 = vld [vmem:[#allocation2 + $0x24] sm:$0xff]
    %v93 = vld [vmem:[#allocation2 + $0x2c] sm:$0xf]
    %v94 = vld [vmem:[#allocation2 + $0x30] sm:$0xff]
    %v95 = vld [vmem:[#allocation2 + $0x38] sm:$0xf]
    %v96 = vld [vmem:[#allocation2 + $0x3c] sm:$0xff]
    %v97 = vld [vmem:[#allocation2 + $0x44] sm:$0xf]
    %v98 = vld [vmem:[#allocation2 + $0x48] sm:$0xff]
    %v99 = vld [vmem:[#allocation2 + $0x50] sm:$0xf]
    %v100 = vld [vmem:[#allocation2 + $0x54] sm:$0xff]
    %v101 = vld [vmem:[#allocation2 + $0x5c] sm:$0xf]
    %v102 = vld [vmem:[#allocation2 + $0x60] sm:$0xff]
    %v103 = vld [vmem:[#allocation2 + $0x68] sm:$0xf]
    %v104 = vld [vmem:[#allocation2 + $0x6c] sm:$0xff]
    %v105 = vld [vmem:[#allocation2 + $0x74] sm:$0xf]
    %v106 = vld [vmem:[#allocation2 + $0x78] sm:$0xff]
    %v107 = vld [vmem:[#allocation2 + $0x80] sm:$0xf]
    %v108 = vld [vmem:[#allocation2 + $0x84] sm:$0xff]
    %v109 = vld [vmem:[#allocation2 + $0x8c] sm:$0xf]
    %v110 = vld [vmem:[#allocation2 + $0x90] sm:$0xff]
    %v111 = vld [vmem:[#allocation2 + $0x98] sm:$0xf]
    %v112 = vld [vmem:[#allocation2 + $0x9c] sm:$0xff]
    %v113 = vld [vmem:[#allocation2 + $0xa4] sm:$0xf]
    %v114 = vld [vmem:[#allocation2 + $0xa8] sm:$0xff]
    %v115 = vld [vmem:[#allocation2 + $0xb0] sm:$0xf]
    %v116 = vld [vmem:[#allocation2 + $0xb4] sm:$0xff]
    %v117 = vld [vmem:[#allocation2 + $0xbc] sm:$0xf]
    %v118 = vld [vmem:[#allocation2 + $0xc0] sm:$0xff]
    %v119 = vld [vmem:[#allocation2 + $0xc8] sm:$0xf]
    %v120 = vld [vmem:[#allocation2 + $0xcc] sm:$0xff]
    %v121 = vld [vmem:[#allocation2 + $0xd4] sm:$0xf]
    %v122 = vld [vmem:[#allocation2 + $0xd8] sm:$0xff]
    %v123 = vld [vmem:[#allocation2 + $0xe0] sm:$0xf]
    %v124 = vld [vmem:[#allocation2 + $0xe4] sm:$0xff]
    %v125 = vld [vmem:[#allocation2 + $0xec] sm:$0xf]
    %v126 = vld [vmem:[#allocation2 + $0xf0] sm:$0xff]
    %v127 = vld [vmem:[#allocation2 + $0xf8] sm:$0xf]
    %v128 = vld [vmem:[#allocation2 + $0xfc] sm:$0xff]
    %v129 = vld [vmem:[#allocation2 + $0x104] sm:$0xf]
    %v130 = vld [vmem:[#allocation2 + $0x108] sm:$0xff]
    %v131 = vld [vmem:[#allocation2 + $0x110] sm:$0xf]
    %v132 = vld [vmem:[#allocation2 + $0x114] sm:$0xff]
    %v133 = vld [vmem:[#allocation2 + $0x11c] sm:$0xf]
    %v134 = vld [vmem:[#allocation2 + $0x120] sm:$0xff]
    %v135 = vld [vmem:[#allocation2 + $0x128] sm:$0xf]
    %v136 = vld [vmem:[#allocation2 + $0x12c] sm:$0xff]
    %v137 = vld [vmem:[#allocation2 + $0x134] sm:$0xf]
    %v138 = vld [vmem:[#allocation2 + $0x138] sm:$0xff]
    %v139 = vld [vmem:[#allocation2 + $0x140] sm:$0xf]
    %v140 = vld [vmem:[#allocation2 + $0x144] sm:$0xff]
    %v141 = vld [vmem:[#allocation2 + $0x14c] sm:$0xf]
    %v142 = vld [vmem:[#allocation2 + $0x150] sm:$0xff]
    %v143 = vld [vmem:[#allocation2 + $0x158] sm:$0xf]
    %v144 = vld [vmem:[#allocation2 + $0x15c] sm:$0xff]
    %v145 = vld [vmem:[#allocation2 + $0x164] sm:$0xf]
    %v146 = vld [vmem:[#allocation2 + $0x168] sm:$0xff]
    %v147 = vld [vmem:[#allocation2 + $0x170] sm:$0xf]
    %v148 = vld [vmem:[#allocation2 + $0x174] sm:$0xff]
    %v149 = vld [vmem:[#allocation2 + $0x17c] sm:$0xf]
    %v150 = vld [vmem:[#allocation2 + $0x180] sm:$0xff]
    %v151 = vld [vmem:[#allocation2 + $0x188] sm:$0xf]
    %v152 = vld [vmem:[#allocation2 + $0x18c] sm:$0xff]
    %v153 = vld [vmem:[#allocation2 + $0x194] sm:$0xf]
    %v154 = vld [vmem:[#allocation2 + $0x198] sm:$0xff]
    %v155 = vld [vmem:[#allocation2 + $0x1a0] sm:$0xf]
    %v156 = vld [vmem:[#allocation2 + $0x1a4] sm:$0xff]
    %v157 = vld [vmem:[#allocation2 + $0x1ac] sm:$0xf]
    %v158 = vld [vmem:[#allocation2 + $0x1b0] sm:$0xff]
    %v159 = vld [vmem:[#allocation2 + $0x1b8] sm:$0xf]
    %v160 = vld [vmem:[#allocation2 + $0x1bc] sm:$0xff]
    %v161 = vld [vmem:[#allocation2 + $0x1c4] sm:$0xf]
    %v162 = vld [vmem:[#allocation2 + $0x1c8] sm:$0xff]
    %v163 = vld [vmem:[#allocation2 + $0x1d0] sm:$0xf]
    %v164 = vld [vmem:[#allocation2 + $0x1d4] sm:$0xff]
    %v165 = vld [vmem:[#allocation2 + $0x1dc] sm:$0xf]
    %v166 = vld [vmem:[#allocation2 + $0x1e0] sm:$0xff]
    %v167 = vld [vmem:[#allocation2 + $0x1e8] sm:$0xf]
    %v168 = vld [vmem:[#allocation2 + $0x1ec] sm:$0xff]
    %v169 = vld [vmem:[#allocation2 + $0x1f4] sm:$0xf]
    %v170 = vld [vmem:[#allocation2 + $0x1f8] sm:$0xff]
    %v171 = vld [vmem:[#allocation2 + $0x200] sm:$0xf]
    %v172 = vld [vmem:[#allocation2 + $0x204] sm:$0xff]
    %v173 = vld [vmem:[#allocation2 + $0x20c] sm:$0xf]
    %v174 = vld [vmem:[#allocation2 + $0x210] sm:$0xff]
    %v175 = vld [vmem:[#allocation2 + $0x218] sm:$0xf]
    %v176 = vld [vmem:[#allocation2 + $0x21c] sm:$0xff]
    %v177 = vld [vmem:[#allocation2 + $0x224] sm:$0xf]
    %v178 = vld [vmem:[#allocation2 + $0x228] sm:$0xff]
    %v179 = vld [vmem:[#allocation2 + $0x230] sm:$0xf]
    %v180 = vld [vmem:[#allocation2 + $0x234] sm:$0xff]
    %v181 = vld [vmem:[#allocation2 + $0x23c] sm:$0xf]
    %v182 = vld [vmem:[#allocation2 + $0x240] sm:$0xff]
    %v183 = vld [vmem:[#allocation2 + $0x248] sm:$0xf]
    %v184 = vld [vmem:[#allocation2 + $0x24c] sm:$0xff]
    %v185 = vld [vmem:[#allocation2 + $0x254] sm:$0xf]
    %v186 = vld [vmem:[#allocation2 + $0x258] sm:$0xff]
    %v187 = vld [vmem:[#allocation2 + $0x260] sm:$0xf]
    %v188 = vld [vmem:[#allocation2 + $0x264] sm:$0xff]
    %v189 = vld [vmem:[#allocation2 + $0x26c] sm:$0xf]
    %v190 = vld [vmem:[#allocation2 + $0x270] sm:$0xff]
    %v191 = vld [vmem:[#allocation2 + $0x278] sm:$0xf]
    %v192 = vld [vmem:[#allocation2 + $0x27c] sm:$0xff]
    %v193 = vld [vmem:[#allocation2 + $0x284] sm:$0xf]
    %v194 = vld [vmem:[#allocation2 + $0x288] sm:$0xff]
    %v195 = vld [vmem:[#allocation2 + $0x290] sm:$0xf]
    %v196 = vld [vmem:[#allocation2 + $0x294] sm:$0xff]
    %v197 = vld [vmem:[#allocation2 + $0x29c] sm:$0xf]
    %v198 = vld [vmem:[#allocation2 + $0x2a0] sm:$0xff]
    %v199 = vld [vmem:[#allocation2 + $0x2a8] sm:$0xf]
    %v200 = vld [vmem:[#allocation2 + $0x2ac] sm:$0xff]
    %v201 = vld [vmem:[#allocation2 + $0x2b4] sm:$0xf]
    %v202 = vld [vmem:[#allocation2 + $0x2b8] sm:$0xff]
    %v203 = vld [vmem:[#allocation2 + $0x2c0] sm:$0xf]
    %v204 = vld [vmem:[#allocation2 + $0x2c4] sm:$0xff]
    %v205 = vld [vmem:[#allocation2 + $0x2cc] sm:$0xf]
    %v206 = vld [vmem:[#allocation2 + $0x2d0] sm:$0xff]
    %v207 = vld [vmem:[#allocation2 + $0x2d8] sm:$0xf]
    %v208 = vld [vmem:[#allocation2 + $0x2dc] sm:$0xff]
    %v209 = vld [vmem:[#allocation2 + $0x2e4] sm:$0xf]
    %v210 = vld [vmem:[#allocation2 + $0x2e8] sm:$0xff]
    %v211 = vld [vmem:[#allocation2 + $0x2f0] sm:$0xf]
    %v212 = vld [vmem:[#allocation2 + $0x2f4] sm:$0xff]
    %v213 = vld [vmem:[#allocation2 + $0x2fc] sm:$0xf]
    %v214 = vld [vmem:[#allocation2 + $0x300] sm:$0xff]
    %v215 = vld [vmem:[#allocation2 + $0x308] sm:$0xf]
    %v216 = vld [vmem:[#allocation2 + $0x30c] sm:$0xff]
    %v217 = vld [vmem:[#allocation2 + $0x314] sm:$0xf]
    %v218 = vld [vmem:[#allocation2 + $0x318] sm:$0xff]
    %v219 = vld [vmem:[#allocation2 + $0x320] sm:$0xf]
    %v220 = vld [vmem:[#allocation2 + $0x324] sm:$0xff]
    %v221 = vld [vmem:[#allocation2 + $0x32c] sm:$0xf]
    %v222 = vld [vmem:[#allocation2 + $0x330] sm:$0xff]
    %v223 = vld [vmem:[#allocation2 + $0x338] sm:$0xf]
    %v224 = vld [vmem:[#allocation2 + $0x33c] sm:$0xff]
    %v225 = vld [vmem:[#allocation2 + $0x344] sm:$0xf]
    %v226 = vld [vmem:[#allocation2 + $0x348] sm:$0xff]
    %v227 = vld [vmem:[#allocation2 + $0x350] sm:$0xf]
    %v228 = vld [vmem:[#allocation2 + $0x354] sm:$0xff]
    %v229 = vld [vmem:[#allocation2 + $0x35c] sm:$0xf]
    %v230 = vld [vmem:[#allocation2 + $0x360] sm:$0xff]
    %v231 = vld [vmem:[#allocation2 + $0x368] sm:$0xf]
    %v232 = vld [vmem:[#allocation2 + $0x36c] sm:$0xff]
    %v233 = vld [vmem:[#allocation2 + $0x374] sm:$0xf]
    %v234 = vld [vmem:[#allocation2 + $0x378] sm:$0xff]
    %v235 = vld [vmem:[#allocation2 + $0x380] sm:$0xf]
    %v236 = vld [vmem:[#allocation2 + $0x384] sm:$0xff]
    %v237 = vld [vmem:[#allocation2 + $0x38c] sm:$0xf]
    %v238 = vld [vmem:[#allocation2 + $0x390] sm:$0xff]
    %v239 = vld [vmem:[#allocation2 + $0x398] sm:$0xf]
    %v240 = vld [vmem:[#allocation2 + $0x39c] sm:$0xff]
    %v241 = vld [vmem:[#allocation2 + $0x3a4] sm:$0xf]
    %v242 = vld [vmem:[#allocation2 + $0x3a8] sm:$0xff]
    %v243 = vld [vmem:[#allocation2 + $0x3b0] sm:$0xf]
    %v244 = vld [vmem:[#allocation2 + $0x3b4] sm:$0xff]
    %v245 = vld [vmem:[#allocation2 + $0x3bc] sm:$0xf]
    %v246 = vld [vmem:[%s2] sm:$0x7]
    %v248 = vlaneseq
    %v249 = vshrl.u32 %v248, 7
    %v250 = vsub.s32 0, %v249
    %v251 = vrot.slane %v246, %v250
    %v252 = vlaneseq
    %v253 = vshrl.u32 %v252, 7
    %v254 = vsub.s32 1, %v253
    %v255 = vrot.slane %v246, %v254
    %v256 = vlaneseq
    %v257 = vshrl.u32 %v256, 7
    %v258 = vsub.s32 2, %v257
    %v259 = vrot.slane %v246, %v258
    %v269 = vunpack.c.l.b16 %v80
    %v270 = vunpack.c.h.b16 %v80
    %v271 = vunpack.c.l.b16 %v81
    %v272 = vunpack.c.h.b16 %v81
    %v273 = vunpack.c.l.b16 %v82
    %v274 = vunpack.c.l.b16 %v83
    %v275 = vunpack.c.h.b16 %v83
    %v276 = vunpack.c.l.b16 %v84
    %v277 = vunpack.c.h.b16 %v84
    %v278 = vunpack.c.l.b16 %v85
    %v279 = vpack.c.b16 %v274, %v269
    %v280 = vpack.c.b16 %v275, %v270
    %v281 = vpack.c.b16 %v276, %v271
    %v282 = vpack.c.b16 %v277, %v272
    %v283 = vpack.c.b16 %v278, %v273
    %v449 = vunpack.c.l.b16 %v86
    %v450 = vunpack.c.h.b16 %v86
    %v451 = vunpack.c.l.b16 %v87
    %v452 = vunpack.c.l.b16 %v88
    %v453 = vunpack.c.h.b16 %v88
    %v454 = vunpack.c.l.b16 %v89
    %v455 = vunpack.c.l.b16 %v90
    %v456 = vunpack.c.h.b16 %v90
    %v457 = vunpack.c.l.b16 %v91
    %v458 = vunpack.c.l.b16 %v92
    %v459 = vunpack.c.h.b16 %v92
    %v460 = vunpack.c.l.b16 %v93
    %v461 = vunpack.c.l.b16 %v94
    %v462 = vunpack.c.h.b16 %v94
    %v463 = vunpack.c.l.b16 %v95
    %v464 = vunpack.c.l.b16 %v96
    %v465 = vunpack.c.h.b16 %v96
    %v466 = vunpack.c.l.b16 %v97
    %v467 = vunpack.c.l.b16 %v98
    %v468 = vunpack.c.h.b16 %v98
    %v469 = vunpack.c.l.b16 %v99
    %v470 = vunpack.c.l.b16 %v100
    %v471 = vunpack.c.h.b16 %v100
    %v472 = vunpack.c.l.b16 %v101
    %v473 = vunpack.c.l.b16 %v102
    %v474 = vunpack.c.h.b16 %v102
    %v475 = vunpack.c.l.b16 %v103
    %v476 = vunpack.c.l.b16 %v104
    %v477 = vunpack.c.h.b16 %v104
    %v478 = vunpack.c.l.b16 %v105
    %v479 = vunpack.c.l.b16 %v106
    %v480 = vunpack.c.h.b16 %v106
    %v481 = vunpack.c.l.b16 %v107
    %v482 = vunpack.c.l.b16 %v108
    %v483 = vunpack.c.h.b16 %v108
    %v484 = vunpack.c.l.b16 %v109
    %v485 = vunpack.c.l.b16 %v110
    %v486 = vunpack.c.h.b16 %v110
    %v487 = vunpack.c.l.b16 %v111
    %v488 = vunpack.c.l.b16 %v112
    %v489 = vunpack.c.h.b16 %v112
    %v490 = vunpack.c.l.b16 %v113
    %v491 = vunpack.c.l.b16 %v114
    %v492 = vunpack.c.h.b16 %v114
    %v493 = vunpack.c.l.b16 %v115
    %v494 = vunpack.c.l.b16 %v116
    %v495 = vunpack.c.h.b16 %v116
    %v496 = vunpack.c.l.b16 %v117
    %v497 = vunpack.c.l.b16 %v118
    %v498 = vunpack.c.h.b16 %v118
    %v499 = vunpack.c.l.b16 %v119
    %v500 = vunpack.c.l.b16 %v120
    %v501 = vunpack.c.h.b16 %v120
    %v502 = vunpack.c.l.b16 %v121
    %v503 = vunpack.c.l.b16 %v122
    %v504 = vunpack.c.h.b16 %v122
    %v505 = vunpack.c.l.b16 %v123
    %v506 = vunpack.c.l.b16 %v124
    %v507 = vunpack.c.h.b16 %v124
    %v508 = vunpack.c.l.b16 %v125
    %v509 = vunpack.c.l.b16 %v126
    %v510 = vunpack.c.h.b16 %v126
    %v511 = vunpack.c.l.b16 %v127
    %v512 = vunpack.c.l.b16 %v128
    %v513 = vunpack.c.h.b16 %v128
    %v514 = vunpack.c.l.b16 %v129
    %v515 = vunpack.c.l.b16 %v130
    %v516 = vunpack.c.h.b16 %v130
    %v517 = vunpack.c.l.b16 %v131
    %v518 = vunpack.c.l.b16 %v132
    %v519 = vunpack.c.h.b16 %v132
    %v520 = vunpack.c.l.b16 %v133
    %v521 = vunpack.c.l.b16 %v134
    %v522 = vunpack.c.h.b16 %v134
    %v523 = vunpack.c.l.b16 %v135
    %v524 = vunpack.c.l.b16 %v136
    %v525 = vunpack.c.h.b16 %v136
    %v526 = vunpack.c.l.b16 %v137
    %v527 = vunpack.c.l.b16 %v138
    %v528 = vunpack.c.h.b16 %v138
    %v529 = vunpack.c.l.b16 %v139
    %v530 = vunpack.c.l.b16 %v140
    %v531 = vunpack.c.h.b16 %v140
    %v532 = vunpack.c.l.b16 %v141
    %v533 = vunpack.c.l.b16 %v142
    %v534 = vunpack.c.h.b16 %v142
    %v535 = vunpack.c.l.b16 %v143
    %v536 = vunpack.c.l.b16 %v144
    %v537 = vunpack.c.h.b16 %v144
    %v538 = vunpack.c.l.b16 %v145
    %v539 = vunpack.c.l.b16 %v146
    %v540 = vunpack.c.h.b16 %v146
    %v541 = vunpack.c.l.b16 %v147
    %v542 = vunpack.c.l.b16 %v148
    %v543 = vunpack.c.h.b16 %v148
    %v544 = vunpack.c.l.b16 %v149
    %v545 = vunpack.c.l.b16 %v150
    %v546 = vunpack.c.h.b16 %v150
    %v547 = vunpack.c.l.b16 %v151
    %v548 = vunpack.c.l.b16 %v152
    %v549 = vunpack.c.h.b16 %v152
    %v550 = vunpack.c.l.b16 %v153
    %v551 = vunpack.c.l.b16 %v154
    %v552 = vunpack.c.h.b16 %v154
    %v553 = vunpack.c.l.b16 %v155
    %v554 = vunpack.c.l.b16 %v156
    %v555 = vunpack.c.h.b16 %v156
    %v556 = vunpack.c.l.b16 %v157
    %v557 = vunpack.c.l.b16 %v158
    %v558 = vunpack.c.h.b16 %v158
    %v559 = vunpack.c.l.b16 %v159
    %v560 = vunpack.c.l.b16 %v160
    %v561 = vunpack.c.h.b16 %v160
    %v562 = vunpack.c.l.b16 %v161
    %v563 = vunpack.c.l.b16 %v162
    %v564 = vunpack.c.h.b16 %v162
    %v565 = vunpack.c.l.b16 %v163
    %v566 = vunpack.c.l.b16 %v164
    %v567 = vunpack.c.h.b16 %v164
    %v568 = vunpack.c.l.b16 %v165
    %v569 = vunpack.c.l.b16 %v166
    %v570 = vunpack.c.h.b16 %v166
    %v571 = vunpack.c.l.b16 %v167
    %v572 = vunpack.c.l.b16 %v168
    %v573 = vunpack.c.h.b16 %v168
    %v574 = vunpack.c.l.b16 %v169
    %v575 = vunpack.c.l.b16 %v170
    %v576 = vunpack.c.h.b16 %v170
    %v577 = vunpack.c.l.b16 %v171
    %v578 = vunpack.c.l.b16 %v172
    %v579 = vunpack.c.h.b16 %v172
    %v580 = vunpack.c.l.b16 %v173
    %v581 = vunpack.c.l.b16 %v174
    %v582 = vunpack.c.h.b16 %v174
    %v583 = vunpack.c.l.b16 %v175
    %v584 = vunpack.c.l.b16 %v176
    %v585 = vunpack.c.h.b16 %v176
    %v586 = vunpack.c.l.b16 %v177
    %v587 = vunpack.c.l.b16 %v178
    %v588 = vunpack.c.h.b16 %v178
    %v589 = vunpack.c.l.b16 %v179
    %v590 = vunpack.c.l.b16 %v180
    %v591 = vunpack.c.h.b16 %v180
    %v592 = vunpack.c.l.b16 %v181
    %v593 = vunpack.c.l.b16 %v182
    %v594 = vunpack.c.h.b16 %v182
    %v595 = vunpack.c.l.b16 %v183
    %v596 = vunpack.c.l.b16 %v184
    %v597 = vunpack.c.h.b16 %v184
    %v598 = vunpack.c.l.b16 %v185
    %v599 = vunpack.c.l.b16 %v186
    %v600 = vunpack.c.h.b16 %v186
    %v601 = vunpack.c.l.b16 %v187
    %v602 = vunpack.c.l.b16 %v188
    %v603 = vunpack.c.h.b16 %v188
    %v604 = vunpack.c.l.b16 %v189
    %v605 = vunpack.c.l.b16 %v190
    %v606 = vunpack.c.h.b16 %v190
    %v607 = vunpack.c.l.b16 %v191
    %v608 = vunpack.c.l.b16 %v192
    %v609 = vunpack.c.h.b16 %v192
    %v610 = vunpack.c.l.b16 %v193
    %v611 = vunpack.c.l.b16 %v194
    %v612 = vunpack.c.h.b16 %v194
    %v613 = vunpack.c.l.b16 %v195
    %v614 = vunpack.c.l.b16 %v196
    %v615 = vunpack.c.h.b16 %v196
    %v616 = vunpack.c.l.b16 %v197
    %v617 = vunpack.c.l.b16 %v198
    %v618 = vunpack.c.h.b16 %v198
    %v619 = vunpack.c.l.b16 %v199
    %v620 = vunpack.c.l.b16 %v200
    %v621 = vunpack.c.h.b16 %v200
    %v622 = vunpack.c.l.b16 %v201
    %v623 = vunpack.c.l.b16 %v202
    %v624 = vunpack.c.h.b16 %v202
    %v625 = vunpack.c.l.b16 %v203
    %v626 = vunpack.c.l.b16 %v204
    %v627 = vunpack.c.h.b16 %v204
    %v628 = vunpack.c.l.b16 %v205
    %v629 = vunpack.c.l.b16 %v206
    %v630 = vunpack.c.h.b16 %v206
    %v631 = vunpack.c.l.b16 %v207
    %v632 = vunpack.c.l.b16 %v208
    %v633 = vunpack.c.h.b16 %v208
    %v634 = vunpack.c.l.b16 %v209
    %v635 = vunpack.c.l.b16 %v210
    %v636 = vunpack.c.h.b16 %v210
    %v637 = vunpack.c.l.b16 %v211
    %v638 = vunpack.c.l.b16 %v212
    %v639 = vunpack.c.h.b16 %v212
    %v640 = vunpack.c.l.b16 %v213
    %v641 = vunpack.c.l.b16 %v214
    %v642 = vunpack.c.h.b16 %v214
    %v643 = vunpack.c.l.b16 %v215
    %v644 = vunpack.c.l.b16 %v216
    %v645 = vunpack.c.h.b16 %v216
    %v646 = vunpack.c.l.b16 %v217
    %v647 = vunpack.c.l.b16 %v218
    %v648 = vunpack.c.h.b16 %v218
    %v649 = vunpack.c.l.b16 %v219
    %v650 = vunpack.c.l.b16 %v220
    %v651 = vunpack.c.h.b16 %v220
    %v652 = vunpack.c.l.b16 %v221
    %v653 = vunpack.c.l.b16 %v222
    %v654 = vunpack.c.h.b16 %v222
    %v655 = vunpack.c.l.b16 %v223
    %v656 = vunpack.c.l.b16 %v224
    %v657 = vunpack.c.h.b16 %v224
    %v658 = vunpack.c.l.b16 %v225
    %v659 = vunpack.c.l.b16 %v226
    %v660 = vunpack.c.h.b16 %v226
    %v661 = vunpack.c.l.b16 %v227
    %v662 = vunpack.c.l.b16 %v228
    %v663 = vunpack.c.h.b16 %v228
    %v664 = vunpack.c.l.b16 %v229
    %v665 = vunpack.c.l.b16 %v230
    %v666 = vunpack.c.h.b16 %v230
    %v667 = vunpack.c.l.b16 %v231
    %v668 = vunpack.c.l.b16 %v232
    %v669 = vunpack.c.h.b16 %v232
    %v670 = vunpack.c.l.b16 %v233
    %v671 = vunpack.c.l.b16 %v234
    %v672 = vunpack.c.h.b16 %v234
    %v673 = vunpack.c.l.b16 %v235
    %v674 = vunpack.c.l.b16 %v236
    %v675 = vunpack.c.h.b16 %v236
    %v676 = vunpack.c.l.b16 %v237
    %v677 = vunpack.c.l.b16 %v238
    %v678 = vunpack.c.h.b16 %v238
    %v679 = vunpack.c.l.b16 %v239
    %v680 = vunpack.c.l.b16 %v240
    %v681 = vunpack.c.h.b16 %v240
    %v682 = vunpack.c.l.b16 %v241
    %v683 = vunpack.c.l.b16 %v242
    %v684 = vunpack.c.h.b16 %v242
    %v685 = vunpack.c.l.b16 %v243
    %v686 = vunpack.c.l.b16 %v244
    %v687 = vunpack.c.h.b16 %v244
    %v688 = vunpack.c.l.b16 %v245
    %v689 = vpack.c.b16 %v452, %v449
    %v690 = vpack.c.b16 %v453, %v450
    %v691 = vpack.c.b16 %v454, %v451
    %v692 = vpack.c.b16 %v458, %v455
    %v693 = vpack.c.b16 %v459, %v456
    %v694 = vpack.c.b16 %v460, %v457
    %v695 = vpack.c.b16 %v464, %v461
    %v696 = vpack.c.b16 %v465, %v462
    %v697 = vpack.c.b16 %v466, %v463
    %v698 = vpack.c.b16 %v470, %v467
    %v699 = vpack.c.b16 %v471, %v468
    %v700 = vpack.c.b16 %v472, %v469
    %v701 = vpack.c.b16 %v476, %v473
    %v702 = vpack.c.b16 %v477, %v474
    %v703 = vpack.c.b16 %v478, %v475
    %v704 = vpack.c.b16 %v482, %v479
    %v705 = vpack.c.b16 %v483, %v480
    %v706 = vpack.c.b16 %v484, %v481
    %v707 = vpack.c.b16 %v488, %v485
    %v708 = vpack.c.b16 %v489, %v486
    %v709 = vpack.c.b16 %v490, %v487
    %v710 = vpack.c.b16 %v494, %v491
    %v711 = vpack.c.b16 %v495, %v492
    %v712 = vpack.c.b16 %v496, %v493
    %v713 = vpack.c.b16 %v500, %v497
    %v714 = vpack.c.b16 %v501, %v498
    %v715 = vpack.c.b16 %v502, %v499
    %v716 = vpack.c.b16 %v506, %v503
    %v717 = vpack.c.b16 %v507, %v504
    %v718 = vpack.c.b16 %v508, %v505
    %v719 = vpack.c.b16 %v512, %v509
    %v720 = vpack.c.b16 %v513, %v510
    %v721 = vpack.c.b16 %v514, %v511
    %v722 = vpack.c.b16 %v518, %v515
    %v723 = vpack.c.b16 %v519, %v516
    %v724 = vpack.c.b16 %v520, %v517
    %v725 = vpack.c.b16 %v524, %v521
    %v726 = vpack.c.b16 %v525, %v522
    %v727 = vpack.c.b16 %v526, %v523
    %v728 = vpack.c.b16 %v530, %v527
    %v729 = vpack.c.b16 %v531, %v528
    %v730 = vpack.c.b16 %v532, %v529
    %v731 = vpack.c.b16 %v536, %v533
    %v732 = vpack.c.b16 %v537, %v534
    %v733 = vpack.c.b16 %v538, %v535
    %v734 = vpack.c.b16 %v542, %v539
    %v735 = vpack.c.b16 %v543, %v540
    %v736 = vpack.c.b16 %v544, %v541
    %v737 = vpack.c.b16 %v548, %v545
    %v738 = vpack.c.b16 %v549, %v546
    %v739 = vpack.c.b16 %v550, %v547
    %v740 = vpack.c.b16 %v554, %v551
    %v741 = vpack.c.b16 %v555, %v552
    %v742 = vpack.c.b16 %v556, %v553
    %v743 = vpack.c.b16 %v560, %v557
    %v744 = vpack.c.b16 %v561, %v558
    %v745 = vpack.c.b16 %v562, %v559
    %v746 = vpack.c.b16 %v566, %v563
    %v747 = vpack.c.b16 %v567, %v564
    %v748 = vpack.c.b16 %v568, %v565
    %v749 = vpack.c.b16 %v572, %v569
    %v750 = vpack.c.b16 %v573, %v570
    %v751 = vpack.c.b16 %v574, %v571
    %v752 = vpack.c.b16 %v578, %v575
    %v753 = vpack.c.b16 %v579, %v576
    %v754 = vpack.c.b16 %v580, %v577
    %v755 = vpack.c.b16 %v584, %v581
    %v756 = vpack.c.b16 %v585, %v582
    %v757 = vpack.c.b16 %v586, %v583
    %v758 = vpack.c.b16 %v590, %v587
    %v759 = vpack.c.b16 %v591, %v588
    %v760 = vpack.c.b16 %v592, %v589
    %v761 = vpack.c.b16 %v596, %v593
    %v762 = vpack.c.b16 %v597, %v594
    %v763 = vpack.c.b16 %v598, %v595
    %v764 = vpack.c.b16 %v602, %v599
    %v765 = vpack.c.b16 %v603, %v600
    %v766 = vpack.c.b16 %v604, %v601
    %v767 = vpack.c.b16 %v608, %v605
    %v768 = vpack.c.b16 %v609, %v606
    %v769 = vpack.c.b16 %v610, %v607
    %v770 = vpack.c.b16 %v614, %v611
    %v771 = vpack.c.b16 %v615, %v612
    %v772 = vpack.c.b16 %v616, %v613
    %v773 = vpack.c.b16 %v620, %v617
    %v774 = vpack.c.b16 %v621, %v618
    %v775 = vpack.c.b16 %v622, %v619
    %v776 = vpack.c.b16 %v626, %v623
    %v777 = vpack.c.b16 %v627, %v624
    %v778 = vpack.c.b16 %v628, %v625
    %v779 = vpack.c.b16 %v632, %v629
    %v780 = vpack.c.b16 %v633, %v630
    %v781 = vpack.c.b16 %v634, %v631
    %v782 = vpack.c.b16 %v638, %v635
    %v783 = vpack.c.b16 %v639, %v636
    %v784 = vpack.c.b16 %v640, %v637
    %v785 = vpack.c.b16 %v644, %v641
    %v786 = vpack.c.b16 %v645, %v642
    %v787 = vpack.c.b16 %v646, %v643
    %v788 = vpack.c.b16 %v650, %v647
    %v789 = vpack.c.b16 %v651, %v648
    %v790 = vpack.c.b16 %v652, %v649
    %v791 = vpack.c.b16 %v656, %v653
    %v792 = vpack.c.b16 %v657, %v654
    %v793 = vpack.c.b16 %v658, %v655
    %v794 = vpack.c.b16 %v662, %v659
    %v795 = vpack.c.b16 %v663, %v660
    %v796 = vpack.c.b16 %v664, %v661
    %v797 = vpack.c.b16 %v668, %v665
    %v798 = vpack.c.b16 %v669, %v666
    %v799 = vpack.c.b16 %v670, %v667
    %v800 = vpack.c.b16 %v674, %v671
    %v801 = vpack.c.b16 %v675, %v672
    %v802 = vpack.c.b16 %v676, %v673
    %v803 = vpack.c.b16 %v680, %v677
    %v804 = vpack.c.b16 %v681, %v678
    %v805 = vpack.c.b16 %v682, %v679
    %v806 = vpack.c.b16 %v686, %v683
    %v807 = vpack.c.b16 %v687, %v684
    %v808 = vpack.c.b16 %v688, %v685
    %929 = vmatprep.subr.bf16.mxu0 %v690
    %930 = vmatpush1.bf16.msra.mxu0 %v689
    %931 = vmatprep.subr.bf16.mxu0 %v693
    %932 = vmatpush1.bf16.msra.mxu0 %v692
    %933 = vmatprep.subr.bf16.mxu0 %v696
    %934 = vmatpush1.bf16.msra.mxu0 %v695
    %935 = vmatprep.subr.bf16.mxu0 %v699
    %936 = vmatpush1.bf16.msra.mxu0 %v698
    %937 = vmatprep.subr.bf16.mxu0 %v702
    %938 = vmatpush1.bf16.msra.mxu0 %v701
    %939 = vmatprep.subr.bf16.mxu0 %v705
    %940 = vmatpush1.bf16.msra.mxu0 %v704
    %941 = vmatprep.subr.bf16.mxu0 %v708
    %942 = vmatpush1.bf16.msra.mxu0 %v707
    %943 = vmatprep.subr.bf16.mxu0 %v711
    %944 = vmatpush1.bf16.msra.mxu0 %v710
    %945 = vmatprep.subr.bf16.mxu0 %v714
    %946 = vmatpush1.bf16.msra.mxu0 %v713
    %947 = vmatprep.subr.bf16.mxu0 %v717
    %948 = vmatpush1.bf16.msra.mxu0 %v716
    %949 = vmatprep.subr.bf16.mxu0 %v720
    %950 = vmatpush1.bf16.msra.mxu0 %v719
    %951 = vmatprep.subr.bf16.mxu0 %v723
    %952 = vmatpush1.bf16.msra.mxu0 %v722
    %953 = vmatprep.subr.bf16.mxu0 %v726
    %954 = vmatpush1.bf16.msra.mxu0 %v725
    %955 = vmatprep.subr.bf16.mxu0 %v729
    %956 = vmatpush1.bf16.msra.mxu0 %v728
    %957 = vmatprep.subr.bf16.mxu0 %v732
    %958 = vmatpush1.bf16.msra.mxu0 %v731
    %959 = vmatprep.subr.bf16.mxu0 %v735
    %960 = vmatpush1.bf16.msra.mxu0 %v734
    %961 = vmatprep.mubr.bf16.mxu0 %v280
    %962 = vmatmul.mubr.bf16.gmra.mrb[0].mxu0 %v279
    %v963 = vpop.f32.mrb[0].mxu0
    %v964 = vadd.f32 %v251, %v963
    %v965 = vpop.f32.mrb[0].mxu0
    %v966 = vadd.f32 %v255, %v965
    %v967 = vpop.f32.mrb[0].mxu0
    %v968 = vadd.f32 %v251, %v967
    %v969 = vpop.f32.mrb[0].mxu0
    %v970 = vadd.f32 %v255, %v969
    %971 = vdwg.mxu0
    %972 = vmatprep.subr.bf16.mxu0 %v738
    %973 = vmatpush1.bf16.msra.mxu0 %v737
    %974 = vmatprep.subr.bf16.mxu0 %v741
    %975 = vmatpush1.bf16.msra.mxu0 %v740
    %976 = vmatprep.subr.bf16.mxu0 %v744
    %977 = vmatpush1.bf16.msra.mxu0 %v743
    %978 = vmatprep.subr.bf16.mxu0 %v747
    %979 = vmatpush1.bf16.msra.mxu0 %v746
    %980 = vmatprep.subr.bf16.mxu0 %v750
    %981 = vmatpush1.bf16.msra.mxu0 %v749
    %982 = vmatprep.subr.bf16.mxu0 %v753
    %983 = vmatpush1.bf16.msra.mxu0 %v752
    %984 = vmatprep.subr.bf16.mxu0 %v756
    %985 = vmatpush1.bf16.msra.mxu0 %v755
    %986 = vmatprep.subr.bf16.mxu0 %v759
    %987 = vmatpush1.bf16.msra.mxu0 %v758
    %988 = vmatprep.subr.bf16.mxu0 %v762
    %989 = vmatpush1.bf16.msra.mxu0 %v761
    %990 = vmatprep.subr.bf16.mxu0 %v765
    %991 = vmatpush1.bf16.msra.mxu0 %v764
    %992 = vmatprep.subr.bf16.mxu0 %v768
    %993 = vmatpush1.bf16.msra.mxu0 %v767
    %994 = vmatprep.subr.bf16.mxu0 %v771
    %995 = vmatpush1.bf16.msra.mxu0 %v770
    %996 = vmatprep.subr.bf16.mxu0 %v774
    %997 = vmatpush1.bf16.msra.mxu0 %v773
    %998 = vmatprep.subr.bf16.mxu0 %v777
    %999 = vmatpush1.bf16.msra.mxu0 %v776
    %1000 = vmatprep.subr.bf16.mxu0 %v780
    %1001 = vmatpush1.bf16.msra.mxu0 %v779
    %1002 = vmatprep.subr.bf16.mxu0 %v783
    %1003 = vmatpush1.bf16.msra.mxu0 %v782
    %1004 = vmatprep.mubr.bf16.mxu0 %v282
    %1005 = vmatmul.mubr.bf16.gmra.mrb[0].mxu0 %v281
    %v1006 = vpop.f32.mrb[0].mxu0
    %v1007 = vadd.f32 %v964, %v1006
    %v1008 = vpop.f32.mrb[0].mxu0
    %v1009 = vadd.f32 %v966, %v1008
    %v1010 = vpop.f32.mrb[0].mxu0
    %v1011 = vadd.f32 %v968, %v1010
    %v1012 = vpop.f32.mrb[0].mxu0
    %v1013 = vadd.f32 %v970, %v1012
    %1014 = vdwg.mxu0
    %1015 = vmatprep.subr.bf16.mxu0 %v786
    %1016 = vmatpush1.bf16.msra.mxu0 %v785
    %1017 = vmatprep.subr.bf16.mxu0 %v789
    %1018 = vmatpush1.bf16.msra.mxu0 %v788
    %1019 = vmatprep.subr.bf16.mxu0 %v792
    %1020 = vmatpush1.bf16.msra.mxu0 %v791
    %1021 = vmatprep.subr.bf16.mxu0 %v795
    %1022 = vmatpush1.bf16.msra.mxu0 %v794
    %1023 = vmatprep.subr.bf16.mxu0 %v798
    %1024 = vmatpush1.bf16.msra.mxu0 %v797
    %1025 = vmatprep.subr.bf16.mxu0 %v801
    %1026 = vmatpush1.bf16.msra.mxu0 %v800
    %1027 = vmatprep.subr.bf16.mxu0 %v804
    %1028 = vmatpush1.bf16.msra.mxu0 %v803
    %1029 = vmatprep.subr.bf16.mxu0 %v807
    %1030 = vmatpush1.bf16.msra.mxu0 %v806
    %1031 = vmatprep.subr.bf16.mxu0 0
    %1032 = vmatpush1.bf16.msra.mxu0 0
    %1033 = vmatprep.subr.bf16.mxu0 0
    %1034 = vmatpush1.bf16.msra.mxu0 0
    %1035 = vmatprep.subr.bf16.mxu0 0
    %1036 = vmatpush1.bf16.msra.mxu0 0
    %1037 = vmatprep.subr.bf16.mxu0 0
    %1038 = vmatpush1.bf16.msra.mxu0 0
    %1039 = vmatprep.subr.bf16.mxu0 0
    %1040 = vmatpush1.bf16.msra.mxu0 0
    %1041 = vmatprep.subr.bf16.mxu0 0
    %1042 = vmatpush1.bf16.msra.mxu0 0
    %1043 = vmatprep.subr.bf16.mxu0 0
    %1044 = vmatpush1.bf16.msra.mxu0 0
    %1045 = vmatprep.subr.bf16.mxu0 0
    %1046 = vmatpush1.bf16.msra.mxu0 0
    %1047 = vmatprep.mubr.bf16.mxu0 0
    %1048 = vmatmul.mubr.bf16.gmra.mrb[0].mxu0 %v283
    %v1049 = vpop.f32.mrb[0].mxu0
    %v1050 = vadd.f32 %v1007, %v1049
    %v1051 = vpop.f32.mrb[0].mxu0
    %v1052 = vadd.f32 %v1009, %v1051
    %v1053 = vpop.f32.mrb[0].mxu0
    %v1054 = vadd.f32 %v1011, %v1053
    %v1055 = vpop.f32.mrb[0].mxu0
    %v1056 = vadd.f32 %v1013, %v1055
    %1057 = vdwg.mxu0
    %1058 = vmatprep.subr.bf16.mxu0 0
    %1059 = vmatpush1.bf16.msra.mxu0 %v691
    %1060 = vmatprep.subr.bf16.mxu0 0
    %1061 = vmatpush1.bf16.msra.mxu0 %v694
    %1062 = vmatprep.subr.bf16.mxu0 0
    %1063 = vmatpush1.bf16.msra.mxu0 %v697
    %1064 = vmatprep.subr.bf16.mxu0 0
    %1065 = vmatpush1.bf16.msra.mxu0 %v700
    %1066 = vmatprep.subr.bf16.mxu0 0
    %1067 = vmatpush1.bf16.msra.mxu0 %v703
    %1068 = vmatprep.subr.bf16.mxu0 0
    %1069 = vmatpush1.bf16.msra.mxu0 %v706
    %1070 = vmatprep.subr.bf16.mxu0 0
    %1071 = vmatpush1.bf16.msra.mxu0 %v709
    %1072 = vmatprep.subr.bf16.mxu0 0
    %1073 = vmatpush1.bf16.msra.mxu0 %v712
    %1074 = vmatprep.subr.bf16.mxu0 0
    %1075 = vmatpush1.bf16.msra.mxu0 %v715
    %1076 = vmatprep.subr.bf16.mxu0 0
    %1077 = vmatpush1.bf16.msra.mxu0 %v718
    %1078 = vmatprep.subr.bf16.mxu0 0
    %1079 = vmatpush1.bf16.msra.mxu0 %v721
    %1080 = vmatprep.subr.bf16.mxu0 0
    %1081 = vmatpush1.bf16.msra.mxu0 %v724
    %1082 = vmatprep.subr.bf16.mxu0 0
    %1083 = vmatpush1.bf16.msra.mxu0 %v727
    %1084 = vmatprep.subr.bf16.mxu0 0
    %1085 = vmatpush1.bf16.msra.mxu0 %v730
    %1086 = vmatprep.subr.bf16.mxu0 0
    %1087 = vmatpush1.bf16.msra.mxu0 %v733
    %1088 = vmatprep.subr.bf16.mxu0 0
    %1089 = vmatpush1.bf16.msra.mxu0 %v736
    %1090 = vmatprep.mubr.bf16.mxu0 %v280
    %1091 = vmatmul.mubr.bf16.gmra.mrb[0].mxu0 %v279
    %v1092 = vpop.f32.mrb[0].mxu0
    %v1093 = vadd.f32 %v259, %v1092
    %v1094 = vpop.f32.mrb[0].mxu0
    %v1095 = vpop.f32.mrb[0].mxu0
    %v1096 = vadd.f32 %v259, %v1095
    %v1097 = vpop.f32.mrb[0].mxu0
    %1098 = vdwg.mxu0
    %1099 = vmatprep.subr.bf16.mxu0 0
    %1100 = vmatpush1.bf16.msra.mxu0 %v739
    %1101 = vmatprep.subr.bf16.mxu0 0
    %1102 = vmatpush1.bf16.msra.mxu0 %v742
    %1103 = vmatprep.subr.bf16.mxu0 0
    %1104 = vmatpush1.bf16.msra.mxu0 %v745
    %1105 = vmatprep.subr.bf16.mxu0 0
    %1106 = vmatpush1.bf16.msra.mxu0 %v748
    %1107 = vmatprep.subr.bf16.mxu0 0
    %1108 = vmatpush1.bf16.msra.mxu0 %v751
    %1109 = vmatprep.subr.bf16.mxu0 0
    %1110 = vmatpush1.bf16.msra.mxu0 %v754
    %1111 = vmatprep.subr.bf16.mxu0 0
    %1112 = vmatpush1.bf16.msra.mxu0 %v757
    %1113 = vmatprep.subr.bf16.mxu0 0
    %1114 = vmatpush1.bf16.msra.mxu0 %v760
    %1115 = vmatprep.subr.bf16.mxu0 0
    %1116 = vmatpush1.bf16.msra.mxu0 %v763
    %1117 = vmatprep.subr.bf16.mxu0 0
    %1118 = vmatpush1.bf16.msra.mxu0 %v766
    %1119 = vmatprep.subr.bf16.mxu0 0
    %1120 = vmatpush1.bf16.msra.mxu0 %v769
    %1121 = vmatprep.subr.bf16.mxu0 0
    %1122 = vmatpush1.bf16.msra.mxu0 %v772
    %1123 = vmatprep.subr.bf16.mxu0 0
    %1124 = vmatpush1.bf16.msra.mxu0 %v775
    %1125 = vmatprep.subr.bf16.mxu0 0
    %1126 = vmatpush1.bf16.msra.mxu0 %v778
    %1127 = vmatprep.subr.bf16.mxu0 0
    %1128 = vmatpush1.bf16.msra.mxu0 %v781
    %1129 = vmatprep.subr.bf16.mxu0 0
    %1130 = vmatpush1.bf16.msra.mxu0 %v784
    %1131 = vmatprep.mubr.bf16.mxu0 %v282
    %1132 = vmatmul.mubr.bf16.gmra.mrb[0].mxu0 %v281
    %v1133 = vpop.f32.mrb[0].mxu0
    %v1134 = vadd.f32 %v1093, %v1133
    %v1135 = vpop.f32.mrb[0].mxu0
    %v1136 = vpop.f32.mrb[0].mxu0
    %v1137 = vadd.f32 %v1096, %v1136
    %v1138 = vpop.f32.mrb[0].mxu0
    %1139 = vdwg.mxu0
    %1140 = vmatprep.subr.bf16.mxu0 0
    %1141 = vmatpush1.bf16.msra.mxu0 %v787
    %1142 = vmatprep.subr.bf16.mxu0 0
    %1143 = vmatpush1.bf16.msra.mxu0 %v790
    %1144 = vmatprep.subr.bf16.mxu0 0
    %1145 = vmatpush1.bf16.msra.mxu0 %v793
    %1146 = vmatprep.subr.bf16.mxu0 0
    %1147 = vmatpush1.bf16.msra.mxu0 %v796
    %1148 = vmatprep.subr.bf16.mxu0 0
    %1149 = vmatpush1.bf16.msra.mxu0 %v799
    %1150 = vmatprep.subr.bf16.mxu0 0
    %1151 = vmatpush1.bf16.msra.mxu0 %v802
    %1152 = vmatprep.subr.bf16.mxu0 0
    %1153 = vmatpush1.bf16.msra.mxu0 %v805
    %1154 = vmatprep.subr.bf16.mxu0 0
    %1155 = vmatpush1.bf16.msra.mxu0 %v808
    %1156 = vmatprep.subr.bf16.mxu0 0
    %1157 = vmatpush1.bf16.msra.mxu0 0
    %1158 = vmatprep.subr.bf16.mxu0 0
    %1159 = vmatpush1.bf16.msra.mxu0 0
    %1160 = vmatprep.subr.bf16.mxu0 0
    %1161 = vmatpush1.bf16.msra.mxu0 0
    %1162 = vmatprep.subr.bf16.mxu0 0
    %1163 = vmatpush1.bf16.msra.mxu0 0
    %1164 = vmatprep.subr.bf16.mxu0 0
    %1165 = vmatpush1.bf16.msra.mxu0 0
    %1166 = vmatprep.subr.bf16.mxu0 0
    %1167 = vmatpush1.bf16.msra.mxu0 0
    %1168 = vmatprep.subr.bf16.mxu0 0
    %1169 = vmatpush1.bf16.msra.mxu0 0
    %1170 = vmatprep.subr.bf16.mxu0 0
    %1171 = vmatpush1.bf16.msra.mxu0 0
    %1172 = vmatprep.mubr.bf16.mxu0 0
    %1173 = vmatmul.mubr.bf16.gmra.mrb[0].mxu0 %v283
    %v1174 = vpop.f32.mrb[0].mxu0
    %v1175 = vadd.f32 %v1134, %v1174
    %v1176 = vpop.f32.mrb[0].mxu0
    %v1177 = vpop.f32.mrb[0].mxu0
    %v1178 = vadd.f32 %v1137, %v1177
    %v1179 = vpop.f32.mrb[0].mxu0
    %1180 = vdwg.mxu0
    %v1181 = vmax.f32 %v1050, 0.0
    %v1182 = vmax.f32 %v1052, 0.0
    %v1183 = vmax.f32 %v1175, 0.0
    %v1184 = vmax.f32 %v1054, 0.0
    %v1185 = vmax.f32 %v1056, 0.0
    %v1186 = vmax.f32 %v1178, 0.0
    %v1187 = vpack.c.bf16 %v1184, %v1181
    %v1188 = vpack.c.bf16 %v1185, %v1182
    %v1189 = vpack.c.bf16 %v1186, %v1183
    %v1190 = vld [vmem:[%s3] sm:$0xf]
    %v1191 = vld [vmem:[%s3 + $0x4] sm:$0xf]
    %v1192 = vld [vmem:[%s3 + $0x8] sm:$0xf]
    %v1193 = vld [vmem:[%s3 + $0xc] sm:$0xf]
    %v1194 = vld [vmem:[%s3 + $0x10] sm:$0xf]
    %v1195 = vld [vmem:[%s3 + $0x14] sm:$0xf]
    %v1196 = vld [vmem:[%s3 + $0x18] sm:$0xf]
    %v1197 = vld [vmem:[%s3 + $0x1c] sm:$0xf]
    %v1198 = vld [vmem:[%s3 + $0x20] sm:$0xf]
    %v1199 = vld [vmem:[%s3 + $0x24] sm:$0xf]
    %v1200 = vld [vmem:[%s3 + $0x28] sm:$0xf]
    %v1201 = vld [vmem:[%s3 + $0x2c] sm:$0xf]
    %v1202 = vld [vmem:[%s3 + $0x30] sm:$0xf]
    %v1203 = vld [vmem:[%s3 + $0x34] sm:$0xf]
    %v1204 = vld [vmem:[%s3 + $0x38] sm:$0xf]
    %v1205 = vld [vmem:[%s3 + $0x3c] sm:$0xf]
    %v1206 = vld [vmem:[%s3 + $0x40] sm:$0xf]
    %v1207 = vld [vmem:[%s3 + $0x44] sm:$0xf]
    %v1208 = vld [vmem:[%s3 + $0x48] sm:$0xf]
    %v1209 = vld [vmem:[%s3 + $0x4c] sm:$0xf]
    %v1210 = vld [vmem:[%s3 + $0x50] sm:$0xf]
    %v1211 = vld [vmem:[%s3 + $0x54] sm:$0xf]
    %v1212 = vld [vmem:[%s3 + $0x58] sm:$0xf]
    %v1213 = vld [vmem:[%s3 + $0x5c] sm:$0xf]
    %v1214 = vld [vmem:[%s3 + $0x60] sm:$0xf]
    %v1215 = vld [vmem:[%s3 + $0x64] sm:$0xf]
    %v1216 = vld [vmem:[%s3 + $0x68] sm:$0xf]
    %v1217 = vld [vmem:[%s3 + $0x6c] sm:$0xf]
    %v1218 = vld [vmem:[%s3 + $0x70] sm:$0xf]
    %v1219 = vld [vmem:[%s3 + $0x74] sm:$0xf]
    %v1220 = vld [vmem:[%s3 + $0x78] sm:$0xf]
    %v1221 = vld [vmem:[%s3 + $0x7c] sm:$0xf]
    %v1222 = vld [vmem:[%s3 + $0x80] sm:$0xf]
    %v1223 = vld [vmem:[%s3 + $0x84] sm:$0xf]
    %v1224 = vld [vmem:[%s3 + $0x88] sm:$0xf]
    %v1225 = vld [vmem:[%s3 + $0x8c] sm:$0xf]
    %v1226 = vld [vmem:[%s3 + $0x90] sm:$0xf]
    %v1227 = vld [vmem:[%s3 + $0x94] sm:$0xf]
    %v1228 = vld [vmem:[%s3 + $0x98] sm:$0xf]
    %v1229 = vld [vmem:[%s3 + $0x9c] sm:$0xf]
    %v1230 = vld [vmem:[%s3 + $0xa0] sm:$0xf]
    %v1231 = vld [vmem:[%s3 + $0xa4] sm:$0xf]
    %v1232 = vld [vmem:[%s3 + $0xa8] sm:$0xf]
    %v1233 = vld [vmem:[%s3 + $0xac] sm:$0xf]
    %v1234 = vld [vmem:[%s3 + $0xb0] sm:$0xf]
    %v1235 = vld [vmem:[%s3 + $0xb4] sm:$0xf]
    %v1236 = vld [vmem:[%s3 + $0xb8] sm:$0xf]
    %v1237 = vld [vmem:[%s3 + $0xbc] sm:$0xf]
    %v1238 = vld [vmem:[%s4] sm:$0x1]
    %v1240 = vlaneseq
    %v1241 = vshrl.u32 %v1240, 7
    %v1242 = vsub.s32 0, %v1241
    %v1243 = vrot.slane %v1238, %v1242
    %v1293 = vunpack.c.l.b16 %v1190
    %v1294 = vunpack.c.l.b16 %v1191
    %v1295 = vunpack.c.l.b16 %v1192
    %v1296 = vunpack.c.l.b16 %v1193
    %v1297 = vunpack.c.l.b16 %v1194
    %v1298 = vunpack.c.l.b16 %v1195
    %v1299 = vunpack.c.l.b16 %v1196
    %v1300 = vunpack.c.l.b16 %v1197
    %v1301 = vunpack.c.l.b16 %v1198
    %v1302 = vunpack.c.l.b16 %v1199
    %v1303 = vunpack.c.l.b16 %v1200
    %v1304 = vunpack.c.l.b16 %v1201
    %v1305 = vunpack.c.l.b16 %v1202
    %v1306 = vunpack.c.l.b16 %v1203
    %v1307 = vunpack.c.l.b16 %v1204
    %v1308 = vunpack.c.l.b16 %v1205
    %v1309 = vunpack.c.l.b16 %v1206
    %v1310 = vunpack.c.l.b16 %v1207
    %v1311 = vunpack.c.l.b16 %v1208
    %v1312 = vunpack.c.l.b16 %v1209
    %v1313 = vunpack.c.l.b16 %v1210
    %v1314 = vunpack.c.l.b16 %v1211
    %v1315 = vunpack.c.l.b16 %v1212
    %v1316 = vunpack.c.l.b16 %v1213
    %v1317 = vunpack.c.l.b16 %v1214
    %v1318 = vunpack.c.l.b16 %v1215
    %v1319 = vunpack.c.l.b16 %v1216
    %v1320 = vunpack.c.l.b16 %v1217
    %v1321 = vunpack.c.l.b16 %v1218
    %v1322 = vunpack.c.l.b16 %v1219
    %v1323 = vunpack.c.l.b16 %v1220
    %v1324 = vunpack.c.l.b16 %v1221
    %v1325 = vunpack.c.l.b16 %v1222
    %v1326 = vunpack.c.l.b16 %v1223
    %v1327 = vunpack.c.l.b16 %v1224
    %v1328 = vunpack.c.l.b16 %v1225
    %v1329 = vunpack.c.l.b16 %v1226
    %v1330 = vunpack.c.l.b16 %v1227
    %v1331 = vunpack.c.l.b16 %v1228
    %v1332 = vunpack.c.l.b16 %v1229
    %v1333 = vunpack.c.l.b16 %v1230
    %v1334 = vunpack.c.l.b16 %v1231
    %v1335 = vunpack.c.l.b16 %v1232
    %v1336 = vunpack.c.l.b16 %v1233
    %v1337 = vunpack.c.l.b16 %v1234
    %v1338 = vunpack.c.l.b16 %v1235
    %v1339 = vunpack.c.l.b16 %v1236
    %v1340 = vunpack.c.l.b16 %v1237
    %v1341 = vpack.c.b16 %v1294, %v1293
    %v1342 = vpack.c.b16 %v1296, %v1295
    %v1343 = vpack.c.b16 %v1298, %v1297
    %v1344 = vpack.c.b16 %v1300, %v1299
    %v1345 = vpack.c.b16 %v1302, %v1301
    %v1346 = vpack.c.b16 %v1304, %v1303
    %v1347 = vpack.c.b16 %v1306, %v1305
    %v1348 = vpack.c.b16 %v1308, %v1307
    %v1349 = vpack.c.b16 %v1310, %v1309
    %v1350 = vpack.c.b16 %v1312, %v1311
    %v1351 = vpack.c.b16 %v1314, %v1313
    %v1352 = vpack.c.b16 %v1316, %v1315
    %v1353 = vpack.c.b16 %v1318, %v1317
    %v1354 = vpack.c.b16 %v1320, %v1319
    %v1355 = vpack.c.b16 %v1322, %v1321
    %v1356 = vpack.c.b16 %v1324, %v1323
    %v1357 = vpack.c.b16 %v1326, %v1325
    %v1358 = vpack.c.b16 %v1328, %v1327
    %v1359 = vpack.c.b16 %v1330, %v1329
    %v1360 = vpack.c.b16 %v1332, %v1331
    %v1361 = vpack.c.b16 %v1334, %v1333
    %v1362 = vpack.c.b16 %v1336, %v1335
    %v1363 = vpack.c.b16 %v1338, %v1337
    %v1364 = vpack.c.b16 %v1340, %v1339
    %1389 = vmatprep.subr.bf16.mxu0 0
    %1390 = vmatpush1.bf16.msra.mxu0 %v1341
    %1391 = vmatprep.subr.bf16.mxu0 0
    %1392 = vmatpush1.bf16.msra.mxu0 %v1342
    %1393 = vmatprep.subr.bf16.mxu0 0
    %1394 = vmatpush1.bf16.msra.mxu0 %v1343
    %1395 = vmatprep.subr.bf16.mxu0 0
    %1396 = vmatpush1.bf16.msra.mxu0 %v1344
    %1397 = vmatprep.subr.bf16.mxu0 0
    %1398 = vmatpush1.bf16.msra.mxu0 %v1345
    %1399 = vmatprep.subr.bf16.mxu0 0
    %1400 = vmatpush1.bf16.msra.mxu0 %v1346
    %1401 = vmatprep.subr.bf16.mxu0 0
    %1402 = vmatpush1.bf16.msra.mxu0 %v1347
    %1403 = vmatprep.subr.bf16.mxu0 0
    %1404 = vmatpush1.bf16.msra.mxu0 %v1348
    %1405 = vmatprep.subr.bf16.mxu0 0
    %1406 = vmatpush1.bf16.msra.mxu0 %v1349
    %1407 = vmatprep.subr.bf16.mxu0 0
    %1408 = vmatpush1.bf16.msra.mxu0 %v1350
    %1409 = vmatprep.subr.bf16.mxu0 0
    %1410 = vmatpush1.bf16.msra.mxu0 %v1351
    %1411 = vmatprep.subr.bf16.mxu0 0
    %1412 = vmatpush1.bf16.msra.mxu0 %v1352
    %1413 = vmatprep.subr.bf16.mxu0 0
    %1414 = vmatpush1.bf16.msra.mxu0 %v1353
    %1415 = vmatprep.subr.bf16.mxu0 0
    %1416 = vmatpush1.bf16.msra.mxu0 %v1354
    %1417 = vmatprep.subr.bf16.mxu0 0
    %1418 = vmatpush1.bf16.msra.mxu0 %v1355
    %1419 = vmatprep.subr.bf16.mxu0 0
    %1420 = vmatpush1.bf16.msra.mxu0 %v1356
    %1421 = vmatprep.mubr.bf16.mxu0 %v1188
    %1422 = vmatmul.mubr.bf16.gmra.mrb[0].mxu0 %v1187
    %v1423 = vpop.f32.mrb[0].mxu0
    %v1424 = vadd.f32 %v1243, %v1423
    %v1425 = vpop.f32.mrb[0].mxu0
    %v1426 = vpop.f32.mrb[0].mxu0
    %v1427 = vadd.f32 %v1243, %v1426
    %v1428 = vpop.f32.mrb[0].mxu0
    %1429 = vdwg.mxu0
    %1430 = vmatprep.subr.bf16.mxu0 0
    %1431 = vmatpush1.bf16.msra.mxu0 %v1357
    %1432 = vmatprep.subr.bf16.mxu0 0
    %1433 = vmatpush1.bf16.msra.mxu0 %v1358
    %1434 = vmatprep.subr.bf16.mxu0 0
    %1435 = vmatpush1.bf16.msra.mxu0 %v1359
    %1436 = vmatprep.subr.bf16.mxu0 0
    %1437 = vmatpush1.bf16.msra.mxu0 %v1360
    %1438 = vmatprep.subr.bf16.mxu0 0
    %1439 = vmatpush1.bf16.msra.mxu0 %v1361
    %1440 = vmatprep.subr.bf16.mxu0 0
    %1441 = vmatpush1.bf16.msra.mxu0 %v1362
    %1442 = vmatprep.subr.bf16.mxu0 0
    %1443 = vmatpush1.bf16.msra.mxu0 %v1363
    %1444 = vmatprep.subr.bf16.mxu0 0
    %1445 = vmatpush1.bf16.msra.mxu0 %v1364
    %1446 = vmatprep.subr.bf16.mxu0 0
    %1447 = vmatpush1.bf16.msra.mxu0 0
    %1448 = vmatprep.subr.bf16.mxu0 0
    %1449 = vmatpush1.bf16.msra.mxu0 0
    %1450 = vmatprep.subr.bf16.mxu0 0
    %1451 = vmatpush1.bf16.msra.mxu0 0
    %1452 = vmatprep.subr.bf16.mxu0 0
    %1453 = vmatpush1.bf16.msra.mxu0 0
    %1454 = vmatprep.subr.bf16.mxu0 0
    %1455 = vmatpush1.bf16.msra.mxu0 0
    %1456 = vmatprep.subr.bf16.mxu0 0
    %1457 = vmatpush1.bf16.msra.mxu0 0
    %1458 = vmatprep.subr.bf16.mxu0 0
    %1459 = vmatpush1.bf16.msra.mxu0 0
    %1460 = vmatprep.subr.bf16.mxu0 0
    %1461 = vmatpush1.bf16.msra.mxu0 0
    %1462 = vmatprep.mubr.bf16.mxu0 0
    %1463 = vmatmul.mubr.bf16.gmra.mrb[0].mxu0 %v1189
    %v1464 = vpop.f32.mrb[0].mxu0
    %v1465 = vadd.f32 %v1424, %v1464
    %v1466 = vpop.f32.mrb[0].mxu0
    %v1467 = vpop.f32.mrb[0].mxu0
    %v1468 = vadd.f32 %v1427, %v1467
    %v1469 = vpop.f32.mrb[0].mxu0
    %1470 = vdwg.mxu0
    %v1471 = vmax.f32 %v1465, 0.0
    %v1472 = vmax.f32 %v1468, 0.0
    %v1473 = vpack.c.bf16 %v1472, %v1471
    %v1474 = vld [vmem:[#allocation4] sm:$0xf]
    %v1475 = vld [vmem:[#allocation4 + $0x4] sm:$0xf]
    %v1476 = vld [vmem:[#allocation4 + $0x8] sm:$0xf]
    %v1477 = vld [vmem:[#allocation4 + $0xc] sm:$0xf]
    %v1478 = vld [vmem:[#allocation4 + $0x10] sm:$0xf]
    %v1479 = vld [vmem:[#allocation4 + $0x14] sm:$0xf]
    %v1480 = vld [vmem:[#allocation4 + $0x18] sm:$0xf]
    %v1481 = vld [vmem:[#allocation4 + $0x1c] sm:$0xf]
    %v1482 = vld [vmem:[#allocation4 + $0x20] sm:$0xf]
    %v1483 = vld [vmem:[#allocation4 + $0x24] sm:$0xf]
    %v1484 = vld [vmem:[#allocation4 + $0x28] sm:$0xf]
    %v1485 = vld [vmem:[#allocation4 + $0x2c] sm:$0xf]
    %v1486 = vld [vmem:[#allocation4 + $0x30] sm:$0xf]
    %v1487 = vld [vmem:[#allocation4 + $0x34] sm:$0xf]
    %v1488 = vld [vmem:[#allocation4 + $0x38] sm:$0xf]
    %v1489 = vld [vmem:[#allocation4 + $0x3c] sm:$0xf]
    %v1490 = vld [vmem:[%s6] sm:$0x1]
    %v1492 = vlaneseq
    %v1493 = vshrl.u32 %v1492, 7
    %v1494 = vsub.s32 0, %v1493
    %v1495 = vrot.slane %v1490, %v1494
    %v1513 = vunpack.c.l.b16 %v1474
    %v1514 = vunpack.c.l.b16 %v1475
    %v1515 = vunpack.c.l.b16 %v1476
    %v1516 = vunpack.c.l.b16 %v1477
    %v1517 = vunpack.c.l.b16 %v1478
    %v1518 = vunpack.c.l.b16 %v1479
    %v1519 = vunpack.c.l.b16 %v1480
    %v1520 = vunpack.c.l.b16 %v1481
    %v1521 = vunpack.c.l.b16 %v1482
    %v1522 = vunpack.c.l.b16 %v1483
    %v1523 = vunpack.c.l.b16 %v1484
    %v1524 = vunpack.c.l.b16 %v1485
    %v1525 = vunpack.c.l.b16 %v1486
    %v1526 = vunpack.c.l.b16 %v1487
    %v1527 = vunpack.c.l.b16 %v1488
    %v1528 = vunpack.c.l.b16 %v1489
    %v1529 = vpack.c.b16 %v1514, %v1513
    %v1530 = vpack.c.b16 %v1516, %v1515
    %v1531 = vpack.c.b16 %v1518, %v1517
    %v1532 = vpack.c.b16 %v1520, %v1519
    %v1533 = vpack.c.b16 %v1522, %v1521
    %v1534 = vpack.c.b16 %v1524, %v1523
    %v1535 = vpack.c.b16 %v1526, %v1525
    %v1536 = vpack.c.b16 %v1528, %v1527
    %1545 = vmatprep.subr.bf16.mxu0 0
    %1546 = vmatpush1.bf16.msra.mxu0 %v1529
    %1547 = vmatprep.subr.bf16.mxu0 0
    %1548 = vmatpush1.bf16.msra.mxu0 %v1530
    %1549 = vmatprep.subr.bf16.mxu0 0
    %1550 = vmatpush1.bf16.msra.mxu0 %v1531
    %1551 = vmatprep.subr.bf16.mxu0 0
    %1552 = vmatpush1.bf16.msra.mxu0 %v1532
    %1553 = vmatprep.subr.bf16.mxu0 0
    %1554 = vmatpush1.bf16.msra.mxu0 %v1533
    %1555 = vmatprep.subr.bf16.mxu0 0
    %1556 = vmatpush1.bf16.msra.mxu0 %v1534
    %1557 = vmatprep.subr.bf16.mxu0 0
    %1558 = vmatpush1.bf16.msra.mxu0 %v1535
    %1559 = vmatprep.subr.bf16.mxu0 0
    %1560 = vmatpush1.bf16.msra.mxu0 %v1536
    %1561 = vmatprep.subr.bf16.mxu0 0
    %1562 = vmatpush1.bf16.msra.mxu0 0
    %1563 = vmatprep.subr.bf16.mxu0 0
    %1564 = vmatpush1.bf16.msra.mxu0 0
    %1565 = vmatprep.subr.bf16.mxu0 0
    %1566 = vmatpush1.bf16.msra.mxu0 0
    %1567 = vmatprep.subr.bf16.mxu0 0
    %1568 = vmatpush1.bf16.msra.mxu0 0
    %1569 = vmatprep.subr.bf16.mxu0 0
    %1570 = vmatpush1.bf16.msra.mxu0 0
    %1571 = vmatprep.subr.bf16.mxu0 0
    %1572 = vmatpush1.bf16.msra.mxu0 0
    %1573 = vmatprep.subr.bf16.mxu0 0
    %1574 = vmatpush1.bf16.msra.mxu0 0
    %1575 = vmatprep.subr.bf16.mxu0 0
    %1576 = vmatpush1.bf16.msra.mxu0 0
    %1577 = vmatprep.mubr.bf16.mxu0 0
    %1578 = vmatmul.mubr.bf16.gmra.mrb[0].mxu0 %v1473
    %v1579 = vpop.f32.mrb[0].mxu0
    %v1580 = vadd.f32 %v1495, %v1579
    %v1581 = vpop.f32.mrb[0].mxu0
    %v1582 = vpop.f32.mrb[0].mxu0
    %v1583 = vadd.f32 %v1495, %v1582
    %v1584 = vpop.f32.mrb[0].mxu0
    %1585 = vdwg.mxu0
    %v1586 = vmax.f32 %v1580, 0.0
    %v1587 = vmax.f32 %v1583, 0.0
    %v1588 = vpack.c.bf16 %v1587, %v1586
    %v1589 = vld [vmem:[#allocation6] sm:$0xf]
    %v1590 = vld [vmem:[#allocation6 + $0x4] sm:$0xf]
    %v1591 = vld [vmem:[#allocation6 + $0x8] sm:$0xf]
    %v1592 = vld [vmem:[#allocation6 + $0xc] sm:$0xf]
    %v1593 = vld [vmem:[#allocation6 + $0x10] sm:$0xf]
    %v1594 = vld [vmem:[#allocation6 + $0x14] sm:$0xf]
    %v1595 = vld [vmem:[#allocation6 + $0x18] sm:$0xf]
    %v1596 = vld [vmem:[#allocation6 + $0x1c] sm:$0xf]
    %v1597 = vld [vmem:[#allocation6 + $0x20] sm:$0xf]
    %v1598 = vld [vmem:[#allocation6 + $0x24] sm:$0xf]
    %v1599 = vld [vmem:[#allocation6 + $0x28] sm:$0xf]
    %v1600 = vld [vmem:[#allocation6 + $0x2c] sm:$0xf]
    %v1601 = vld [vmem:[#allocation6 + $0x30] sm:$0xf]
    %v1602 = vld [vmem:[#allocation6 + $0x34] sm:$0xf]
    %v1603 = vld [vmem:[#allocation6 + $0x38] sm:$0xf]
    %v1604 = vld [vmem:[#allocation6 + $0x3c] sm:$0xf]
    %v1605 = vld [vmem:[%s8] sm:$0x1]
    %v1607 = vlaneseq
    %v1608 = vshrl.u32 %v1607, 7
    %v1609 = vsub.s32 0, %v1608
    %v1610 = vrot.slane %v1605, %v1609
    %v1628 = vunpack.c.l.b16 %v1589
    %v1629 = vunpack.c.l.b16 %v1590
    %v1630 = vunpack.c.l.b16 %v1591
    %v1631 = vunpack.c.l.b16 %v1592
    %v1632 = vunpack.c.l.b16 %v1593
    %v1633 = vunpack.c.l.b16 %v1594
    %v1634 = vunpack.c.l.b16 %v1595
    %v1635 = vunpack.c.l.b16 %v1596
    %v1636 = vunpack.c.l.b16 %v1597
    %v1637 = vunpack.c.l.b16 %v1598
    %v1638 = vunpack.c.l.b16 %v1599
    %v1639 = vunpack.c.l.b16 %v1600
    %v1640 = vunpack.c.l.b16 %v1601
    %v1641 = vunpack.c.l.b16 %v1602
    %v1642 = vunpack.c.l.b16 %v1603
    %v1643 = vunpack.c.l.b16 %v1604
    %v1644 = vpack.c.b16 %v1629, %v1628
    %v1645 = vpack.c.b16 %v1631, %v1630
    %v1646 = vpack.c.b16 %v1633, %v1632
    %v1647 = vpack.c.b16 %v1635, %v1634
    %v1648 = vpack.c.b16 %v1637, %v1636
    %v1649 = vpack.c.b16 %v1639, %v1638
    %v1650 = vpack.c.b16 %v1641, %v1640
    %v1651 = vpack.c.b16 %v1643, %v1642
    %1660 = vmatprep.subr.bf16.mxu0 0
    %1661 = vmatpush1.bf16.msra.mxu0 %v1644
    %1662 = vmatprep.subr.bf16.mxu0 0
    %1663 = vmatpush1.bf16.msra.mxu0 %v1645
    %1664 = vmatprep.subr.bf16.mxu0 0
    %1665 = vmatpush1.bf16.msra.mxu0 %v1646
    %1666 = vmatprep.subr.bf16.mxu0 0
    %1667 = vmatpush1.bf16.msra.mxu0 %v1647
    %1668 = vmatprep.subr.bf16.mxu0 0
    %1669 = vmatpush1.bf16.msra.mxu0 %v1648
    %1670 = vmatprep.subr.bf16.mxu0 0
    %1671 = vmatpush1.bf16.msra.mxu0 %v1649
    %1672 = vmatprep.subr.bf16.mxu0 0
    %1673 = vmatpush1.bf16.msra.mxu0 %v1650
    %1674 = vmatprep.subr.bf16.mxu0 0
    %1675 = vmatpush1.bf16.msra.mxu0 %v1651
    %1676 = vmatprep.subr.bf16.mxu0 0
    %1677 = vmatpush1.bf16.msra.mxu0 0
    %1678 = vmatprep.subr.bf16.mxu0 0
    %1679 = vmatpush1.bf16.msra.mxu0 0
    %1680 = vmatprep.subr.bf16.mxu0 0
    %1681 = vmatpush1.bf16.msra.mxu0 0
    %1682 = vmatprep.subr.bf16.mxu0 0
    %1683 = vmatpush1.bf16.msra.mxu0 0
    %1684 = vmatprep.subr.bf16.mxu0 0
    %1685 = vmatpush1.bf16.msra.mxu0 0
    %1686 = vmatprep.subr.bf16.mxu0 0
    %1687 = vmatpush1.bf16.msra.mxu0 0
    %1688 = vmatprep.subr.bf16.mxu0 0
    %1689 = vmatpush1.bf16.msra.mxu0 0
    %1690 = vmatprep.subr.bf16.mxu0 0
    %1691 = vmatpush1.bf16.msra.mxu0 0
    %1692 = vmatprep.mubr.bf16.mxu0 0
    %1693 = vmatmul.mubr.bf16.gmra.mrb[0].mxu0 %v1588
    %v1694 = vpop.f32.mrb[0].mxu0
    %v1695 = vadd.f32 %v1610, %v1694
    %v1696 = vpop.f32.mrb[0].mxu0
    %v1697 = vpop.f32.mrb[0].mxu0
    %v1698 = vadd.f32 %v1610, %v1697
    %v1699 = vpop.f32.mrb[0].mxu0
    %1700 = vdwg.mxu0
    %v1701 = vmax.f32 %v1695, 0.0
    %v1702 = vmax.f32 %v1698, 0.0
    %v1703 = vld [vmem:[%s9] sm:$0x1]
    %v1704 = vunpack.c.l.bf16 %v1703
    %v1705 = vlaneseq
    %v1706 = vshrl.u32 %v1705, 7
    %v1707 = vsub.s32 0, %v1706
    %v1708 = vrot.slane %v1704, %v1707
    %v1709 = vmul.f32 %v1701, %v1708
    %v1710 = vmul.f32 %v1702, %v1708
    %1711 = vadd.xlane.f32.xlu0 %v1709
    %v1712 = vpop.xlane.xlu0 %1711
    %1713 = vadd.xlane.f32.xlu0 %v1710
    %v1714 = vpop.xlane.xlu0 %1713
    %v1715 = vld [vmem:[%s10] sm:$0x1]
    %v1717 = vlaneseq
    %v1718 = vshrl.u32 %v1717, 7
    %v1719 = vsub.s32 0, %v1718
    %v1720 = vrot.slane %v1715, %v1719
    %v1722 = vadd.f32 %v1712, %v1720
    %v1723 = vadd.f32 %v1714, %v1720
    %1724 = vst [vmem:[%s11] sm:$0xff] %v1722
    %1725 = vst [vmem:[%s11 + $0x8] sm:$0xff] %v1723
    // Predicated region
    $region58: #{model_forward.1} parent=1 // pred_check
      _
    $region59: #{model_forward.1} parent=1 // pred_check_branch
      %1727 = sbr.rel (0) target = $region61
    $region60: #{model_forward.1} parent=1 // pred_region
      _
    $region61: #{model_forward.1} parent=1 // pred_fallthru
      _
    // Predicated region
    $region62: #{model_forward.1} parent=1 // pred_check
      _
    $region63: #{model_forward.1} parent=1 // pred_check_branch
      %1729 = sbr.rel (0) target = $region65
    $region64: #{model_forward.1} parent=1 // pred_region
      _
    $region65: #{model_forward.1} parent=1 // pred_fallthru
      _
    %1730 = vsyncpa [#allocation3], 1
    %1731 = vsyncpa [#allocation5], 1

</llo_original>
